<compile_context>
chip_gen: v5e
topology: v5e:2x2
jax: 0.10.0
libtpu: 0.0.40
codegen_flags: <defaults>
</compile_context>

<pallas_src>
import functools

import jax
import jax.numpy as jnp
from jax import lax
from jax.experimental import pallas as pl
from jax.experimental.pallas import tpu as pltpu


def _round_up(a: int, b: int) -> int:
    return pl.cdiv(a, b) * b


# ---------------------------------------------------------------------------
# Portable on-chip Gaussian generator (used when the TPU hardware PRNG is not
# available, e.g. under the Pallas interpreter).
# ---------------------------------------------------------------------------

_H_M1 = 0x7FEB352D                 # lowbias32 multipliers (Chris Wellons)
_H_M2 = 0x846CA68B - (1 << 32)     # int32 two's-complement view of 0x846CA68B


def _srl(x, s):
    # Logical right shift for int32 (s <= 16): arithmetic shift + mask.
    return (x >> s) & ((1 << (32 - s)) - 1)


def _hash32(x):
    """lowbias32 integer hash; int32 arithmetic, wraps mod 2^32."""
    x = x ^ _srl(x, 16)
    x = x * jnp.int32(_H_M1)
    x = x ^ _srl(x, 15)
    x = x * jnp.int32(_H_M2)
    x = x ^ _srl(x, 16)
    return x


def _inv_normal_cdf(p):
    """Acklam's rational approximation to the inverse standard-normal CDF.

    Uses only +,*,/ , sqrt, log, where -- all of which lower in Mosaic and
    under the interpreter (Box-Muller would need sin/cos).
    """
    a1, a2, a3 = -3.969683028665376e+01, 2.209460984245205e+02, -2.759285104469687e+02
    a4, a5, a6 = 1.383577518672690e+02, -3.066479806614716e+01, 2.506628277459239e+00
    b1, b2, b3 = -5.447609879822406e+01, 1.615858368580409e+02, -1.556989798598866e+02
    b4, b5 = 6.680131188771972e+01, -1.328068155288572e+01
    c1, c2, c3 = -7.784894002430293e-03, -3.223964580411365e-01, -2.400758277161838e+00
    c4, c5, c6 = -2.549732539343734e+00, 4.374664141464968e+00, 2.938163982698783e+00
    d1, d2, d3, d4 = (7.784695709041462e-03, 3.224671290700398e-01,
                      2.445134137142996e+00, 3.754408661907416e+00)
    p_low = 0.02425

    # Central region.
    q = p - 0.5
    r = q * q
    num_c = ((((a1 * r + a2) * r + a3) * r + a4) * r + a5) * r + a6
    den_c = ((((b1 * r + b2) * r + b3) * r + b4) * r + b5) * r + 1.0
    x_central = q * num_c / den_c

    # Tails (evaluated on min(p, 1-p); sign-flipped for the upper tail).
    pt = jnp.maximum(jnp.minimum(p, 1.0 - p), 1e-30)
    qt = jnp.sqrt(-2.0 * jnp.log(pt))
    num_t = ((((c1 * qt + c2) * qt + c3) * qt + c4) * qt + c5) * qt + c6
    den_t = (((d1 * qt + d2) * qt + d3) * qt + d4) * qt + 1.0
    x_tail = num_t / den_t
    x_tail = jnp.where(p < 0.5, x_tail, -x_tail)

    use_tail = jnp.logical_or(p < p_low, p > 1.0 - p_low)
    return jnp.where(use_tail, x_tail, x_central)


# ---------------------------------------------------------------------------
# Kernel
# ---------------------------------------------------------------------------

def _awgn_kernel(seed_ref, stdev_ref, x_ref, o_ref, *, hw_prng: bool):
    tr, tf = x_ref.shape

    if hw_prng:
        # TPU hardware PRNG: distinct stream per grid block, f32 normals.
        pltpu.prng_seed(seed_ref[0], pl.program_id(0), pl.program_id(1))
        z = pltpu.stateful_normal((tr, tf), jnp.float32)
    else:
        # Counter-based hash -> uniform(0,1) -> inverse normal CDF.
        i = pl.program_id(0)
        j = pl.program_id(1)
        feat_total = pl.num_programs(1) * tf             # padded feature extent
        row = lax.broadcasted_iota(jnp.int32, (tr, tf), 0) + i * tr
        col = lax.broadcasted_iota(jnp.int32, (tr, tf), 1) + j * tf
        ctr = row * feat_total + col                     # unique id (mod 2^32)
        key = _hash32(seed_ref[0] ^ jnp.int32(0x68E31DA4))
        bits = _hash32(_hash32(ctr + key))               # two rounds for quality
        u = ((bits & jnp.int32(0x7FFFFF)).astype(jnp.float32) + 0.5) * (1.0 / (1 << 23))
        z = _inv_normal_cdf(u)

    noisy = x_ref[...].astype(jnp.float32) + stdev_ref[0] * z
    o_ref[...] = noisy.astype(o_ref.dtype)


# ---------------------------------------------------------------------------
# Tiling heuristic + wrapper
# ---------------------------------------------------------------------------

def _choose_tiles(rows: int, feat: int, itemsize: int,
                  block_budget: int = 2 * 1024 * 1024, min_steps: int = 8):
    """Pick (row_tile, feat_tile): lane-dense blocks of ~block_budget bytes."""
    # Feature tile: full width unless even an 8-row slab busts the budget
    # (very wide activations); otherwise tile in multiples of 128 lanes.
    if feat <= 256 or feat * 8 * itemsize <= block_budget:
        tf = feat
    else:
        tf = max(128, min(feat, ((block_budget // (8 * itemsize)) // 128) * 128))
    fsteps = pl.cdiv(feat, tf)

    # Row tile from the byte budget: multiple of 8 sublanes, <= 2048 rows.
    rows8 = _round_up(max(rows, 1), 8)
    tr = max(8, min(2048, ((block_budget // (tf * itemsize)) // 8) * 8))
    tr = min(tr, rows8)

    # Keep >= min_steps grid steps when the input allows it (pipeline overlap
    # + megacore sharding), but never shrink below 64 rows.
    if pl.cdiv(rows, tr) * fsteps < min_steps and tr > 64:
        tr = min(tr, max(64, _round_up(pl.cdiv(rows8, min_steps), 8)))
    return tr, tf


def awgn_channel(x, seed, stdev=1.0, *, use_hw_prng=None):
    """Pallas implementation of AWGN_Chan.forward(x): x + N(0, stdev^2) noise."""
    orig_shape = x.shape

    # Canonicalize to 2-D [rows, features]; features stay on the lane axis.
    if x.ndim >= 2:
        x2 = x if x.ndim == 2 else x.reshape(-1, orig_shape[-1])
    else:
        flat = x.reshape(-1)
        n = max(flat.shape[0], 1)
        lane = next((c for c in (4096, 2048, 1024, 512, 256, 128) if n % c == 0), 0)
        x2 = flat.reshape(n // lane, lane) if lane else flat.reshape(1, n)
    rows, feat = x2.shape

    tr, tf = _choose_tiles(rows, feat, x2.dtype.itemsize)
    grid = (pl.cdiv(rows, tr), pl.cdiv(feat, tf))   # partial last blocks are clipped

    if use_hw_prng is None:
        use_hw_prng = jax.default_backend() == "tpu"

    seed_arr = jnp.asarray(seed, jnp.int32).reshape((1,))
    stdev_arr = jnp.asarray(stdev, jnp.float32).reshape((1,))

    out = pl.pallas_call(
        functools.partial(_awgn_kernel, hw_prng=bool(use_hw_prng)),
        out_shape=jax.ShapeDtypeStruct((rows, feat), x2.dtype),
        grid=grid,
        in_specs=[
            pl.BlockSpec(memory_space=pltpu.MemorySpace.SMEM),   # seed scalar
            pl.BlockSpec(memory_space=pltpu.MemorySpace.SMEM),   # stdev scalar
            pl.BlockSpec((tr, tf), lambda i, j: (i, j)),
        ],
        out_specs=pl.BlockSpec((tr, tf), lambda i, j: (i, j)),
        compiler_params=pltpu.CompilerParams(
            dimension_semantics=("parallel", "parallel"),
            vmem_limit_bytes=48 * 1024 * 1024,   # safe on v5e/v6e (128 MiB) and v7x (64 MiB)
        ),
    )(seed_arr, stdev_arr, x2)

    return out.reshape(orig_shape)


if __name__ == "__main__":
    STDEV = 0.5
    key = jax.random.PRNGKey(0)
    kx, _ = jax.random.split(key)

    # Main check: enough samples for tight statistics, still small (512 KiB).
    x = 1.0 + 2.0 * jax.random.normal(kx, (512, 256), jnp.float32)

    fwd = jax.jit(lambda xx, seed: awgn_channel(xx, seed, stdev=STDEV))

    out = jax.block_until_ready(fwd(x, jnp.int32(1234)))
    assert out.shape == x.shape and out.dtype == x.dtype, (out.shape, out.dtype)

    # Statistical verification (noise is random -> no elementwise reference):
    # mean ~ 0, std ~ STDEV, noise independent of x.
    noise = (out - x).ravel()
    n_mean = float(jnp.mean(noise))
    n_std = float(jnp.std(noise))
    xc = x.ravel() - jnp.mean(x)
    corr = float(jnp.mean((noise - n_mean) * xc) / (n_std * jnp.std(x) + 1e-12))
    assert abs(n_mean) < 0.02, f"noise mean off: {n_mean}"
    assert abs(n_std - STDEV) < 0.02, f"noise std off: {n_std}"
    assert abs(corr) < 0.05, f"noise correlated with x: {corr}"

    # Deterministic for a fixed seed; different seeds -> different noise.
    out2 = jax.block_until_ready(fwd(x, jnp.int32(1234)))
    out3 = jax.block_until_ready(fwd(x, jnp.int32(4321)))
    assert jnp.array_equal(out, out2), "same seed must reproduce"
    assert not jnp.allclose(out, out3), "different seed must differ"

    # Higher-rank + ragged rows (partial last block, no pad/slice round trip).
    x_small = jax.random.normal(jax.random.PRNGKey(1), (2, 7, 128), jnp.float32)
    out_small = jax.block_until_ready(awgn_channel(x_small, jnp.int32(7), stdev=STDEV))
    assert out_small.shape == x_small.shape and out_small.dtype == x_small.dtype

    # 1-D input exercises the row-folding path.
    x_flat = jax.random.normal(jax.random.PRNGKey(2), (5120,), jnp.float32)
    out_flat = jax.block_until_ready(awgn_channel(x_flat, jnp.int32(3), stdev=STDEV))
    assert out_flat.shape == x_flat.shape

    print("KERNEL_OK")
</pallas_src>

<mosaic_0001>
module attributes {stable_mosaic.version = 11 : i64} {
  func.func @_awgn_kernel(%arg0: i32, %arg1: i32, %arg2: memref<1xi32, #tpu.memory_space<smem>>, %arg3: memref<1xf32, #tpu.memory_space<smem>>, %arg4: memref<64x256xf32, #tpu.memory_space<vmem>>, %arg5: memref<64x256xf32, #tpu.memory_space<vmem>>) attributes {dimension_semantics = [#tpu.dimension_semantics<parallel>, #tpu.dimension_semantics<parallel>], iteration_bounds = array<i64: 8, 1>, scalar_prefetch = 0 : i64, scratch_operands = 0 : i64, tpu.core_type = #tpu.core_type<tc>, window_params = [{transform_indices = @transform_0, window_bounds = array<i64: 1>}, {transform_indices = @transform_1, window_bounds = array<i64: 1>}, {transform_indices = @transform_2, window_bounds = array<i64: 64, 256>}, {transform_indices = @transform_3, window_bounds = array<i64: 64, 256>}]} {
    %0 = tpu.iota {dimensions = array<i32: 0>} : vector<64x256xi32>
    %c64_i32 = arith.constant 64 : i32
    %1 = arith.muli %arg0, %c64_i32 : i32
    %2 = vector.broadcast %1 : i32 to vector<64x256xi32>
    %3 = arith.addi %0, %2 : vector<64x256xi32>
    %4 = tpu.iota {dimensions = array<i32: 1>} : vector<64x256xi32>
    %c256_i32 = arith.constant 256 : i32
    %5 = arith.muli %arg1, %c256_i32 : i32
    %6 = vector.broadcast %5 : i32 to vector<64x256xi32>
    %7 = arith.addi %4, %6 : vector<64x256xi32>
    %c256_i32_0 = arith.constant 256 : i32
    %8 = vector.broadcast %c256_i32_0 : i32 to vector<64x256xi32>
    %9 = arith.muli %3, %8 : vector<64x256xi32>
    %10 = arith.addi %9, %7 : vector<64x256xi32>
    %c0 = arith.constant 0 : index
    %11 = memref.load %arg2[%c0] : memref<1xi32, #tpu.memory_space<smem>>
    %c1759714724_i32 = arith.constant 1759714724 : i32
    %12 = arith.xori %11, %c1759714724_i32 : i32
    %c16_i32 = arith.constant 16 : i32
    %13 = arith.shrsi %12, %c16_i32 : i32
    %c65535_i32 = arith.constant 65535 : i32
    %14 = arith.andi %13, %c65535_i32 : i32
    %15 = arith.xori %12, %14 : i32
    %c2146121005_i32 = arith.constant 2146121005 : i32
    %16 = arith.muli %15, %c2146121005_i32 : i32
    %c15_i32 = arith.constant 15 : i32
    %17 = arith.shrsi %16, %c15_i32 : i32
    %c131071_i32 = arith.constant 131071 : i32
    %18 = arith.andi %17, %c131071_i32 : i32
    %19 = arith.xori %16, %18 : i32
    %c-2073254261_i32 = arith.constant -2073254261 : i32
    %20 = arith.muli %19, %c-2073254261_i32 : i32
    %c16_i32_1 = arith.constant 16 : i32
    %21 = arith.shrsi %20, %c16_i32_1 : i32
    %c65535_i32_2 = arith.constant 65535 : i32
    %22 = arith.andi %21, %c65535_i32_2 : i32
    %23 = arith.xori %20, %22 : i32
    %24 = vector.broadcast %23 : i32 to vector<64x256xi32>
    %25 = arith.addi %10, %24 : vector<64x256xi32>
    %c16_i32_3 = arith.constant 16 : i32
    %26 = vector.broadcast %c16_i32_3 : i32 to vector<64x256xi32>
    %27 = arith.shrsi %25, %26 : vector<64x256xi32>
    %c65535_i32_4 = arith.constant 65535 : i32
    %28 = vector.broadcast %c65535_i32_4 : i32 to vector<64x256xi32>
    %29 = arith.andi %27, %28 : vector<64x256xi32>
    %30 = arith.xori %25, %29 : vector<64x256xi32>
    %c2146121005_i32_5 = arith.constant 2146121005 : i32
    %31 = vector.broadcast %c2146121005_i32_5 : i32 to vector<64x256xi32>
    %32 = arith.muli %30, %31 : vector<64x256xi32>
    %c15_i32_6 = arith.constant 15 : i32
    %33 = vector.broadcast %c15_i32_6 : i32 to vector<64x256xi32>
    %34 = arith.shrsi %32, %33 : vector<64x256xi32>
    %c131071_i32_7 = arith.constant 131071 : i32
    %35 = vector.broadcast %c131071_i32_7 : i32 to vector<64x256xi32>
    %36 = arith.andi %34, %35 : vector<64x256xi32>
    %37 = arith.xori %32, %36 : vector<64x256xi32>
    %c-2073254261_i32_8 = arith.constant -2073254261 : i32
    %38 = vector.broadcast %c-2073254261_i32_8 : i32 to vector<64x256xi32>
    %39 = arith.muli %37, %38 : vector<64x256xi32>
    %c16_i32_9 = arith.constant 16 : i32
    %40 = vector.broadcast %c16_i32_9 : i32 to vector<64x256xi32>
    %41 = arith.shrsi %39, %40 : vector<64x256xi32>
    %c65535_i32_10 = arith.constant 65535 : i32
    %42 = vector.broadcast %c65535_i32_10 : i32 to vector<64x256xi32>
    %43 = arith.andi %41, %42 : vector<64x256xi32>
    %44 = arith.xori %39, %43 : vector<64x256xi32>
    %c16_i32_11 = arith.constant 16 : i32
    %45 = vector.broadcast %c16_i32_11 : i32 to vector<64x256xi32>
    %46 = arith.shrsi %44, %45 : vector<64x256xi32>
    %c65535_i32_12 = arith.constant 65535 : i32
    %47 = vector.broadcast %c65535_i32_12 : i32 to vector<64x256xi32>
    %48 = arith.andi %46, %47 : vector<64x256xi32>
    %49 = arith.xori %44, %48 : vector<64x256xi32>
    %c2146121005_i32_13 = arith.constant 2146121005 : i32
    %50 = vector.broadcast %c2146121005_i32_13 : i32 to vector<64x256xi32>
    %51 = arith.muli %49, %50 : vector<64x256xi32>
    %c15_i32_14 = arith.constant 15 : i32
    %52 = vector.broadcast %c15_i32_14 : i32 to vector<64x256xi32>
    %53 = arith.shrsi %51, %52 : vector<64x256xi32>
    %c131071_i32_15 = arith.constant 131071 : i32
    %54 = vector.broadcast %c131071_i32_15 : i32 to vector<64x256xi32>
    %55 = arith.andi %53, %54 : vector<64x256xi32>
    %56 = arith.xori %51, %55 : vector<64x256xi32>
    %c-2073254261_i32_16 = arith.constant -2073254261 : i32
    %57 = vector.broadcast %c-2073254261_i32_16 : i32 to vector<64x256xi32>
    %58 = arith.muli %56, %57 : vector<64x256xi32>
    %c16_i32_17 = arith.constant 16 : i32
    %59 = vector.broadcast %c16_i32_17 : i32 to vector<64x256xi32>
    %60 = arith.shrsi %58, %59 : vector<64x256xi32>
    %c65535_i32_18 = arith.constant 65535 : i32
    %61 = vector.broadcast %c65535_i32_18 : i32 to vector<64x256xi32>
    %62 = arith.andi %60, %61 : vector<64x256xi32>
    %63 = arith.xori %58, %62 : vector<64x256xi32>
    %c8388607_i32 = arith.constant 8388607 : i32
    %64 = vector.broadcast %c8388607_i32 : i32 to vector<64x256xi32>
    %65 = arith.andi %63, %64 : vector<64x256xi32>
    %66 = arith.sitofp %65 : vector<64x256xi32> to vector<64x256xf32>
    %cst = arith.constant 5.000000e-01 : f32
    %67 = vector.broadcast %cst : f32 to vector<64x256xf32>
    %68 = arith.addf %66, %67 : vector<64x256xf32>
    %cst_19 = arith.constant 1.1920929E-7 : f32
    %69 = vector.broadcast %cst_19 : f32 to vector<64x256xf32>
    %70 = arith.mulf %68, %69 : vector<64x256xf32>
    %cst_20 = arith.constant 5.000000e-01 : f32
    %71 = vector.broadcast %cst_20 : f32 to vector<64x256xf32>
    %72 = arith.subf %70, %71 : vector<64x256xf32>
    %73 = arith.mulf %72, %72 : vector<64x256xf32>
    %cst_21 = arith.constant -39.6968307 : f32
    %74 = vector.broadcast %cst_21 : f32 to vector<64x256xf32>
    %75 = arith.mulf %74, %73 : vector<64x256xf32>
    %cst_22 = arith.constant 220.946106 : f32
    %76 = vector.broadcast %cst_22 : f32 to vector<64x256xf32>
    %77 = arith.addf %75, %76 : vector<64x256xf32>
    %78 = arith.mulf %77, %73 : vector<64x256xf32>
    %cst_23 = arith.constant -275.928497 : f32
    %79 = vector.broadcast %cst_23 : f32 to vector<64x256xf32>
    %80 = arith.addf %78, %79 : vector<64x256xf32>
    %81 = arith.mulf %80, %73 : vector<64x256xf32>
    %cst_24 = arith.constant 138.357758 : f32
    %82 = vector.broadcast %cst_24 : f32 to vector<64x256xf32>
    %83 = arith.addf %81, %82 : vector<64x256xf32>
    %84 = arith.mulf %83, %73 : vector<64x256xf32>
    %cst_25 = arith.constant -30.6647987 : f32
    %85 = vector.broadcast %cst_25 : f32 to vector<64x256xf32>
    %86 = arith.addf %84, %85 : vector<64x256xf32>
    %87 = arith.mulf %86, %73 : vector<64x256xf32>
    %cst_26 = arith.constant 2.50662827 : f32
    %88 = vector.broadcast %cst_26 : f32 to vector<64x256xf32>
    %89 = arith.addf %87, %88 : vector<64x256xf32>
    %cst_27 = arith.constant -54.4760971 : f32
    %90 = vector.broadcast %cst_27 : f32 to vector<64x256xf32>
    %91 = arith.mulf %90, %73 : vector<64x256xf32>
    %cst_28 = arith.constant 161.585831 : f32
    %92 = vector.broadcast %cst_28 : f32 to vector<64x256xf32>
    %93 = arith.addf %91, %92 : vector<64x256xf32>
    %94 = arith.mulf %93, %73 : vector<64x256xf32>
    %cst_29 = arith.constant -155.698975 : f32
    %95 = vector.broadcast %cst_29 : f32 to vector<64x256xf32>
    %96 = arith.addf %94, %95 : vector<64x256xf32>
    %97 = arith.mulf %96, %73 : vector<64x256xf32>
    %cst_30 = arith.constant 66.8013153 : f32
    %98 = vector.broadcast %cst_30 : f32 to vector<64x256xf32>
    %99 = arith.addf %97, %98 : vector<64x256xf32>
    %100 = arith.mulf %99, %73 : vector<64x256xf32>
    %cst_31 = arith.constant -13.2806816 : f32
    %101 = vector.broadcast %cst_31 : f32 to vector<64x256xf32>
    %102 = arith.addf %100, %101 : vector<64x256xf32>
    %103 = arith.mulf %102, %73 : vector<64x256xf32>
    %cst_32 = arith.constant 1.000000e+00 : f32
    %104 = vector.broadcast %cst_32 : f32 to vector<64x256xf32>
    %105 = arith.addf %103, %104 : vector<64x256xf32>
    %106 = arith.mulf %72, %89 : vector<64x256xf32>
    %107 = arith.divf %106, %105 : vector<64x256xf32>
    %cst_33 = arith.constant 1.000000e+00 : f32
    %108 = vector.broadcast %cst_33 : f32 to vector<64x256xf32>
    %109 = arith.subf %108, %70 : vector<64x256xf32>
    %110 = arith.minimumf %70, %109 : vector<64x256xf32>
    %cst_34 = arith.constant 1.000000e-30 : f32
    %111 = vector.broadcast %cst_34 : f32 to vector<64x256xf32>
    %112 = arith.maximumf %110, %111 : vector<64x256xf32>
    %113 = math.log %112 : vector<64x256xf32>
    %cst_35 = arith.constant -2.000000e+00 : f32
    %114 = vector.broadcast %cst_35 : f32 to vector<64x256xf32>
    %115 = arith.mulf %114, %113 : vector<64x256xf32>
    %116 = math.sqrt %115 : vector<64x256xf32>
    %cst_36 = arith.constant -0.0077848942 : f32
    %117 = vector.broadcast %cst_36 : f32 to vector<64x256xf32>
    %118 = arith.mulf %117, %116 : vector<64x256xf32>
    %cst_37 = arith.constant -0.322396457 : f32
    %119 = vector.broadcast %cst_37 : f32 to vector<64x256xf32>
    %120 = arith.addf %118, %119 : vector<64x256xf32>
    %121 = arith.mulf %120, %116 : vector<64x256xf32>
    %cst_38 = arith.constant -2.40075827 : f32
    %122 = vector.broadcast %cst_38 : f32 to vector<64x256xf32>
    %123 = arith.addf %121, %122 : vector<64x256xf32>
    %124 = arith.mulf %123, %116 : vector<64x256xf32>
    %cst_39 = arith.constant -2.54973245 : f32
    %125 = vector.broadcast %cst_39 : f32 to vector<64x256xf32>
    %126 = arith.addf %124, %125 : vector<64x256xf32>
    %127 = arith.mulf %126, %116 : vector<64x256xf32>
    %cst_40 = arith.constant 4.37466431 : f32
    %128 = vector.broadcast %cst_40 : f32 to vector<64x256xf32>
    %129 = arith.addf %127, %128 : vector<64x256xf32>
    %130 = arith.mulf %129, %116 : vector<64x256xf32>
    %cst_41 = arith.constant 2.938164 : f32
    %131 = vector.broadcast %cst_41 : f32 to vector<64x256xf32>
    %132 = arith.addf %130, %131 : vector<64x256xf32>
    %cst_42 = arith.constant 0.00778469583 : f32
    %133 = vector.broadcast %cst_42 : f32 to vector<64x256xf32>
    %134 = arith.mulf %133, %116 : vector<64x256xf32>
    %cst_43 = arith.constant 0.322467119 : f32
    %135 = vector.broadcast %cst_43 : f32 to vector<64x256xf32>
    %136 = arith.addf %134, %135 : vector<64x256xf32>
    %137 = arith.mulf %136, %116 : vector<64x256xf32>
    %cst_44 = arith.constant 2.44513416 : f32
    %138 = vector.broadcast %cst_44 : f32 to vector<64x256xf32>
    %139 = arith.addf %137, %138 : vector<64x256xf32>
    %140 = arith.mulf %139, %116 : vector<64x256xf32>
    %cst_45 = arith.constant 3.7544086 : f32
    %141 = vector.broadcast %cst_45 : f32 to vector<64x256xf32>
    %142 = arith.addf %140, %141 : vector<64x256xf32>
    %143 = arith.mulf %142, %116 : vector<64x256xf32>
    %cst_46 = arith.constant 1.000000e+00 : f32
    %144 = vector.broadcast %cst_46 : f32 to vector<64x256xf32>
    %145 = arith.addf %143, %144 : vector<64x256xf32>
    %146 = arith.divf %132, %145 : vector<64x256xf32>
    %cst_47 = arith.constant 5.000000e-01 : f32
    %147 = vector.broadcast %cst_47 : f32 to vector<64x256xf32>
    %148 = arith.cmpf olt, %70, %147 : vector<64x256xf32>
    %cst_48 = arith.constant 0.000000e+00 : f32
    %149 = vector.broadcast %cst_48 : f32 to vector<64x256xf32>
    %150 = arith.subf %149, %146 : vector<64x256xf32>
    %151 = arith.select %148, %146, %150 : vector<64x256xi1>, vector<64x256xf32>
    %cst_49 = arith.constant 2.425000e-02 : f32
    %152 = vector.broadcast %cst_49 : f32 to vector<64x256xf32>
    %153 = arith.cmpf olt, %70, %152 : vector<64x256xf32>
    %cst_50 = arith.constant 9.757500e-01 : f32
    %154 = vector.broadcast %cst_50 : f32 to vector<64x256xf32>
    %155 = arith.cmpf ogt, %70, %154 : vector<64x256xf32>
    %156 = arith.ori %153, %155 : vector<64x256xi1>
    %157 = arith.select %156, %151, %107 : vector<64x256xi1>, vector<64x256xf32>
    %c0_51 = arith.constant 0 : index
    %c0_52 = arith.constant 0 : index
    %158 = vector.load %arg4[%c0_51, %c0_52] : memref<64x256xf32, #tpu.memory_space<vmem>>, vector<64x256xf32>
    %c0_53 = arith.constant 0 : index
    %159 = memref.load %arg3[%c0_53] : memref<1xf32, #tpu.memory_space<smem>>
    %160 = vector.broadcast %159 : f32 to vector<64x256xf32>
    %161 = arith.mulf %160, %157 : vector<64x256xf32>
    %162 = arith.addf %158, %161 : vector<64x256xf32>
    %c0_54 = arith.constant 0 : index
    %c0_55 = arith.constant 0 : index
    %163 = vector.load %arg5[%c0_54, %c0_55] : memref<64x256xf32, #tpu.memory_space<vmem>>, vector<64x256xf32>
    tpu.vector_store %arg5[%c0_54, %c0_55], %162 {strides = array<i32>} : memref<64x256xf32, #tpu.memory_space<vmem>>, vector<64x256xf32>,
    return
  }
  func.func @transform_0(%arg0: i32, %arg1: i32) -> i32 {
    %c0_i32 = arith.constant 0 : i32
    %c0_i32_0 = arith.constant 0 : i32
    return %c0_i32 : i32
  }
  func.func @transform_1(%arg0: i32, %arg1: i32) -> i32 {
    %c0_i32 = arith.constant 0 : i32
    %c0_i32_0 = arith.constant 0 : i32
    return %c0_i32 : i32
  }
  func.func @transform_2(%arg0: i32, %arg1: i32) -> (i32, i32) {
    %c0_i32 = arith.constant 0 : i32
    return %arg0, %arg1 : i32, i32
  }
  func.func @transform_3(%arg0: i32, %arg1: i32) -> (i32, i32) {
    %c0_i32 = arith.constant 0 : i32
    return %arg0, %arg1 : i32, i32
  }
}

</mosaic_0001>

<llo_original>
// kernel: _lambda_.1
$region0: #{_lambda_.1}
  #allocation0 [shape = 'u32[]', space=smem, size = 0x4, offset = 0x4, fixed_abs, tag = 'smem constant byte address 0x4 - core index']
  #allocation1 [shape = 'u32[72,128]{1,0:T(1,128)}', space=vmem, size = 0x9000, scoped, tag = 'internal scratch']
  #allocation2 [shape = 's32[1]{0:T(128)S(6)}', space=smem, size = 0x200, scoped, tag = 'scoped memory for _lambda_.1']
  #allocation3 [shape = 'f32[1]{0:T(128)S(6)}', space=smem, size = 0x200, scoped, tag = 'scoped memory for _lambda_.1']
  %s0 = inlined_call_operand.<no memory space> [shape: s32[1], index: 0, kind: input, shape index: {}]
  %s1 = inlined_call_operand.<no memory space> [shape: f32[1], index: 1, kind: input, shape index: {}]
  %s2 = inlined_call_operand.hbm [shape: f32[512,256], index: 2, kind: input, shape index: {}]
  %s3 = inlined_call_operand.hbm [shape: f32[512,256], index: 3, kind: output, shape index: {}]
  %s4 = sld [smem:[#allocation0]]
  $region49: #{_lambda_.1} parent=0
    _
  %s6 = ssub.s32 1, %s4
  %s7 = scalar_select 0, %s6, %s4
  %8 = sst [smem:[#allocation2]] %s0
  %9 = sst [smem:[#allocation3]] %s1
  $region1: #{_lambda_.1} parent=0
    #allocation4 [shape = 'u8[131072]{0}', space=vmem, size = 0x20000, scoped, tag = 'input window, operand 2']
    #allocation5 [shape = 's32[2]{0}', space=sflag, size = 0x8, scoped, tag = 'scoped memory for _lambda_.1']
    #allocation6 [shape = 's32[2]{0}', space=sflag, size = 0x8, scoped, tag = 'scoped memory for _lambda_.1']
    #allocation7 [shape = 'u8[131072]{0}', space=vmem, size = 0x20000, scoped, tag = 'output window, operand 0']
    %10 = vsyncpa [#allocation5], 0
    %s11 = scalar_lea.sflag [#allocation5], 1
    %12 = vsyncpa %s11, 0
    %13 = vsyncpa [#allocation6], 0
    %s14 = scalar_lea.sflag [#allocation6], 1
    %15 = vsyncpa %s14, 0
    loop: start=0, step=1, limit=10
    $region2: #{_lambda_.1} parent=1 // loop_pre_header
      _
    $region3: #{_lambda_.1} parent=1 // loop_header
      %s17 = sphi 0, %s21
      %p18 = scmp.ge.s32.totalorder %s17, 10
      %s24 = sphi 0, %s36
      %s25 = sphi 0, %s32
      %s26 = sphi 0, %s24
      %s27 = sphi 0, %s25
      %s28 = sphi 0, %s26
      %s29 = sphi 0, %s27
      %s37 = sphi 0, %s37
      %s39 = sphi 0, %s37
      %s40 = sphi 0, %s39
      %s54 = sphi 0, %s40
      %s58 = sphi 0, %s58
      %s60 = sphi 0, %s58
      %s61 = sphi 0, %s60
      %s75 = sphi 0, %s61
      %s83 = sphi 0, %s85
      %s86 = sphi 0, %s83
      %s87 = sphi 0, %s86
      %s103 = sphi 0, %s87
      %s111 = sphi 0, %s113
      %s114 = sphi 0, %s111
      %s115 = sphi 0, %s114
      %s131 = sphi 0, %s115
    $region4: #{_lambda_.1} parent=1 // loop_header_branch
      %20 = sbr.rel (%p18) target = $region8
    $region5: #{_lambda_.1} parent=1 // loop_body
      %s22 = ssub.s32 %s17, 1
      %s23 = ssub.s32 %s17, 2
      %s30 = sadd.s32 1, %s25
      %p31 = scmp.ge.s32.totalorder %s30, 1
      %s32 = scalar_select %p31, 0, %s30
      %s33 = sadd.s32 1, %s24
      %s34 = scalar_select %p31, %s33, %s24
      %p35 = scmp.ge.s32.totalorder %s34, 8
      %s36 = scalar_select %p35, 0, %s34
      %s38 = sadd.s32 %s37, 1
      %p41 = scmp.eq.s32.totalorder %s17, 7
      %p42 = scmp.ne.s32.totalorder %s37, %s39
      %p43 = scmp.eq.s32.totalorder %s17, 0
      %p44 = por %p42, %p43
      %p45 = scmp.ne.s32.totalorder %s37, %s39
      %p46 = scmp.eq.s32.totalorder %s22, 7
      %p47 = por %p45, %p46
      %p48 = scmp.ne.s32.totalorder %s39, %s40
      %p49 = scmp.eq.s32.totalorder %s22, 0
      %p50 = por %p48, %p49
      %p51 = scmp.ne.s32.totalorder %s39, %s40
      %p52 = scmp.eq.s32.totalorder %s23, 7
      %p53 = por %p51, %p52
      %p55 = scmp.ne.s32.totalorder %s40, %s54
      %p56 = scmp.eq.s32.totalorder %s23, 0
      %p57 = por %p55, %p56
      %s59 = sadd.s32 %s58, 1
      %p62 = scmp.eq.s32.totalorder %s17, 7
      %p63 = scmp.ne.s32.totalorder %s58, %s60
      %p64 = scmp.eq.s32.totalorder %s17, 0
      %p65 = por %p63, %p64
      %p66 = scmp.ne.s32.totalorder %s58, %s60
      %p67 = scmp.eq.s32.totalorder %s22, 7
      %p68 = por %p66, %p67
      %p69 = scmp.ne.s32.totalorder %s60, %s61
      %p70 = scmp.eq.s32.totalorder %s22, 0
      %p71 = por %p69, %p70
      %p72 = scmp.ne.s32.totalorder %s60, %s61
      %p73 = scmp.eq.s32.totalorder %s23, 7
      %p74 = por %p72, %p73
      %p76 = scmp.ne.s32.totalorder %s61, %s75
      %p77 = scmp.eq.s32.totalorder %s23, 0
      %p78 = por %p76, %p77
      %s79 = ssub.s32 %s24, %s36
      %s80 = ssub.s32 %s25, %s32
      %s81 = sor.u32 %s79, %s80
      %p82 = scmp.eq.s32.totalorder %s81, 0
      %s84 = sadd.s32 %s83, 1
      %s85 = scalar_select %p82, %s83, %s84
      %p88 = pneg %p82
      %p89 = scmp.eq.s32.totalorder %s17, 7
      %p90 = por %p88, %p89
      %p91 = scmp.ne.s32.totalorder %s83, %s86
      %p92 = scmp.eq.s32.totalorder %s17, 0
      %p93 = por %p91, %p92
      %p94 = scmp.ne.s32.totalorder %s83, %s86
      %p95 = scmp.eq.s32.totalorder %s22, 7
      %p96 = por %p94, %p95
      %p97 = scmp.ne.s32.totalorder %s86, %s87
      %p98 = scmp.eq.s32.totalorder %s22, 0
      %p99 = por %p97, %p98
      %p100 = scmp.ne.s32.totalorder %s86, %s87
      %p101 = scmp.eq.s32.totalorder %s23, 7
      %p102 = por %p100, %p101
      %p104 = scmp.ne.s32.totalorder %s87, %s103
      %p105 = scmp.eq.s32.totalorder %s23, 0
      %p106 = por %p104, %p105
      %s107 = ssub.s32 %s24, %s36
      %s108 = ssub.s32 %s25, %s32
      %s109 = sor.u32 %s107, %s108
      %p110 = scmp.eq.s32.totalorder %s109, 0
      %s112 = sadd.s32 %s111, 1
      %s113 = scalar_select %p110, %s111, %s112
      %p116 = pneg %p110
      %p117 = scmp.eq.s32.totalorder %s17, 7
      %p118 = por %p116, %p117
      %p119 = scmp.ne.s32.totalorder %s111, %s114
      %p120 = scmp.eq.s32.totalorder %s17, 0
      %p121 = por %p119, %p120
      %p122 = scmp.ne.s32.totalorder %s111, %s114
      %p123 = scmp.eq.s32.totalorder %s22, 7
      %p124 = por %p122, %p123
      %p125 = scmp.ne.s32.totalorder %s114, %s115
      %p126 = scmp.eq.s32.totalorder %s22, 0
      %p127 = por %p125, %p126
      %p128 = scmp.ne.s32.totalorder %s114, %s115
      %p129 = scmp.eq.s32.totalorder %s23, 7
      %p130 = por %p128, %p129
      %p132 = scmp.ne.s32.totalorder %s115, %s131
      %p133 = scmp.eq.s32.totalorder %s23, 0
      %p134 = por %p132, %p133
      %p135 = scmp.le.s32.totalorder 1, %s17
      %p136 = scmp.lt.s32.totalorder %s17, 9
      %p137 = pnand %p135, %p136
      %p138 = pneg %p137
      // Predicated region
      $region9: #{_lambda_.1} parent=5 // pred_check
        _
      $region10: #{_lambda_.1} parent=5 // pred_check_branch
        %140 = sbr.rel (%p137) target = $region12
      $region11: #{_lambda_.1} parent=5 // pred_region
        %s141 = ssub.s32 %s17, 1
        // Predicated region
        $region13: #{_lambda_.1} parent=11 // pred_check
          %p142 = pneg %p50
        $region14: #{_lambda_.1} parent=11 // pred_check_branch
          %144 = sbr.rel (%p142) target = $region16
        $region15: #{_lambda_.1} parent=11 // pred_region
          _
        $region16: #{_lambda_.1} parent=11 // pred_fallthru
          _
        // Predicated region
        $region17: #{_lambda_.1} parent=11 // pred_check
          %p145 = pneg %p71
        $region18: #{_lambda_.1} parent=11 // pred_check_branch
          %147 = sbr.rel (%p145) target = $region20
        $region19: #{_lambda_.1} parent=11 // pred_region
          _
        $region20: #{_lambda_.1} parent=11 // pred_fallthru
          _
      $region12: #{_lambda_.1} parent=5 // pred_fallthru
        _
      %p148 = scmp.lt.s32.totalorder %s17, 8
      // Predicated region
      $region21: #{_lambda_.1} parent=5 // pred_check
        %p149 = pneg %p148
      $region22: #{_lambda_.1} parent=5 // pred_check_branch
        %151 = sbr.rel (%p149) target = $region24
      $region23: #{_lambda_.1} parent=5 // pred_region
        // Predicated region
        $region25: #{_lambda_.1} parent=23 // pred_check
          %p152 = pneg %p93
        $region26: #{_lambda_.1} parent=23 // pred_check_branch
          %154 = sbr.rel (%p152) target = $region28
        $region27: #{_lambda_.1} parent=23 // pred_region
          %s155 = sand.u32 %s83, 1
          %s156 = scalar_lea.sflag [#allocation5], %s155
          %s157 = sand.u32 %s83, 1
          %s158 = smul.addr %s157, 128
          %s159 = scalar_lea.vmem [#allocation4], %s158
          %s160 = smul.u32 8, %s24
          %s161 = smul.u32 2, %s25
          %163 = vsyncadd %s156, 0
          %s164 = smul.addr %s160, 2
          %s165 = sadd.s32 %s161, %s164
          %s166 = smul.addr %s165, 8
          %s167 = scalar_lea.hbm %s2, %s166
          %s168 = sshll.u32 %s167, 4
          %s169 = int_to_ptr.hbm [resolvable:$true] %s168
          %s170 = sshll.u32 %s159, 4
          %s171 = int_to_ptr.vmem [resolvable:$true] %s170
          %176 = dma.hbm_to_vmem [thread:$0]  %s169, 2048, %s171, %s156, 256, 256, 16
        $region28: #{_lambda_.1} parent=23 // pred_fallthru
          _
      $region24: #{_lambda_.1} parent=5 // pred_fallthru
        _
      %p177 = scmp.le.s32.totalorder 1, %s17
      %p178 = scmp.lt.s32.totalorder %s17, 9
      %p179 = pnand %p177, %p178
      %p180 = pneg %p179
      // Predicated region
      $region29: #{_lambda_.1} parent=5 // pred_check
        _
      $region30: #{_lambda_.1} parent=5 // pred_check_branch
        %182 = sbr.rel (%p179) target = $region32
      $region31: #{_lambda_.1} parent=5 // pred_region
        %s183 = ssub.s32 %s17, 1
        %s184 = sand.u32 %s86, 1
        %s185 = scalar_lea.sflag [#allocation5], %s184
        %s186 = sand.u32 %s86, 1
        %s187 = smul.addr %s186, 128
        %s188 = scalar_lea.vmem [#allocation4], %s187
        // Predicated region
        $region33: #{_lambda_.1} parent=31 // pred_check
          %p189 = pneg %p99
        $region34: #{_lambda_.1} parent=31 // pred_check_branch
          %191 = sbr.rel (%p189) target = $region36
        $region35: #{_lambda_.1} parent=31 // pred_region
          %193 = dma.done %s185, 2048
        $region36: #{_lambda_.1} parent=31 // pred_fallthru
          _
        %p194 = pneg %p50
        %p195 = pneg %p47
        %p196 = pneg %p71
        %p197 = pneg %p68
        %s198 = sand.u32 %s86, 1
        %s199 = scalar_lea.sflag [#allocation5], %s198
        %s200 = sand.u32 %s86, 1
        %s201 = smul.addr %s200, 128
        %s202 = scalar_lea.vmem [#allocation4], %s201
        %p203 = pneg %p99
        %p204 = pneg %p96
        %p205 = pneg %p127
        %p206 = pneg %p124
        %s207 = sand.u32 %s114, 1
        %s208 = scalar_lea.sflag [#allocation6], %s207
        %s209 = sand.u32 %s114, 1
        %s210 = smul.addr %s209, 128
        %s211 = scalar_lea.vmem [#allocation7], %s210
        %s212 = smul.u32 8, %s26
        %s213 = smul.u32 2, %s27
        %s214 = smul.u32 8, %s26
        %s215 = smul.u32 2, %s27
        %v216 = vlaneseq
        %v217 = vshrl.u32 %v216, 7
        %v218 = vadd.s32 %v217, 8
        %v219 = vadd.s32 %v217, 16
        %v220 = vadd.s32 %v217, 24
        %v221 = vadd.s32 %v217, 32
        %v222 = vadd.s32 %v217, 40
        %v223 = vadd.s32 %v217, 48
        %v224 = vadd.s32 %v217, 56
        %s225 = smul.u32 %s26, 64
        %v226 = vstv %s225
        %v227 = vadd.s32 %v217, %v226
        %v228 = vadd.s32 %v218, %v226
        %v229 = vadd.s32 %v219, %v226
        %v230 = vadd.s32 %v220, %v226
        %v231 = vadd.s32 %v221, %v226
        %v232 = vadd.s32 %v222, %v226
        %v233 = vadd.s32 %v223, %v226
        %v234 = vadd.s32 %v224, %v226
        %v235 = vlaneseq
        %v236 = vand.u32 %v235, 127
        %v237 = vadd.s32 %v236, 128
        %s238 = smul.u32 %s27, 256
        %v239 = vstv %s238
        %v240 = vadd.s32 %v236, %v239
        %v241 = vadd.s32 %v237, %v239
        %v242 = vmul.u32 %v227, 256
        %v243 = vmul.u32 %v228, 256
        %v244 = vmul.u32 %v229, 256
        %v245 = vmul.u32 %v230, 256
        %v246 = vmul.u32 %v231, 256
        %v247 = vmul.u32 %v232, 256
        %v248 = vmul.u32 %v233, 256
        %v249 = vmul.u32 %v234, 256
        %v250 = vadd.s32 %v242, %v240
        %v251 = vadd.s32 %v242, %v241
        %v252 = vadd.s32 %v243, %v240
        %v253 = vadd.s32 %v243, %v241
        %v254 = vadd.s32 %v244, %v240
        %v255 = vadd.s32 %v244, %v241
        %v256 = vadd.s32 %v245, %v240
        %v257 = vadd.s32 %v245, %v241
        %v258 = vadd.s32 %v246, %v240
        %v259 = vadd.s32 %v246, %v241
        %v260 = vadd.s32 %v247, %v240
        %v261 = vadd.s32 %v247, %v241
        %v262 = vadd.s32 %v248, %v240
        %v263 = vadd.s32 %v248, %v241
        %v264 = vadd.s32 %v249, %v240
        %v265 = vadd.s32 %v249, %v241
        %s266 = sld [smem:[#allocation2]]
        %s267 = sxor.u32 %s266, 1759714724
        %s268 = sshra.s32 %s267, 16
        %s269 = sand.u32 %s268, 65535
        %s270 = sxor.u32 %s267, %s269
        %s271 = smul.u32 %s270, 2146121005
        %s272 = sshra.s32 %s271, 15
        %s273 = sand.u32 %s272, 131071
        %s274 = sxor.u32 %s271, %s273
        %s275 = smul.u32 %s274, 2221713035
        %s276 = sshra.s32 %s275, 16
        %s277 = sand.u32 %s276, 65535
        %s278 = sxor.u32 %s275, %s277
        %v279 = vstv %s278
        %v280 = vadd.s32 %v250, %v279
        %v281 = vadd.s32 %v251, %v279
        %v282 = vadd.s32 %v252, %v279
        %v283 = vadd.s32 %v253, %v279
        %v284 = vadd.s32 %v254, %v279
        %v285 = vadd.s32 %v255, %v279
        %v286 = vadd.s32 %v256, %v279
        %v287 = vadd.s32 %v257, %v279
        %v288 = vadd.s32 %v258, %v279
        %v289 = vadd.s32 %v259, %v279
        %v290 = vadd.s32 %v260, %v279
        %v291 = vadd.s32 %v261, %v279
        %v292 = vadd.s32 %v262, %v279
        %v293 = vadd.s32 %v263, %v279
        %v294 = vadd.s32 %v264, %v279
        %v295 = vadd.s32 %v265, %v279
        %v296 = vshra.s32 %v280, 16
        %v297 = vshra.s32 %v281, 16
        %v298 = vshra.s32 %v282, 16
        %v299 = vshra.s32 %v283, 16
        %v300 = vshra.s32 %v284, 16
        %v301 = vshra.s32 %v285, 16
        %v302 = vshra.s32 %v286, 16
        %v303 = vshra.s32 %v287, 16
        %v304 = vshra.s32 %v288, 16
        %v305 = vshra.s32 %v289, 16
        %v306 = vshra.s32 %v290, 16
        %v307 = vshra.s32 %v291, 16
        %v308 = vshra.s32 %v292, 16
        %v309 = vshra.s32 %v293, 16
        %v310 = vshra.s32 %v294, 16
        %v311 = vshra.s32 %v295, 16
        %v312 = vand.u32 %v296, 65535
        %v313 = vand.u32 %v297, 65535
        %v314 = vand.u32 %v298, 65535
        %v315 = vand.u32 %v299, 65535
        %v316 = vand.u32 %v300, 65535
        %v317 = vand.u32 %v301, 65535
        %v318 = vand.u32 %v302, 65535
        %v319 = vand.u32 %v303, 65535
        %v320 = vand.u32 %v304, 65535
        %v321 = vand.u32 %v305, 65535
        %v322 = vand.u32 %v306, 65535
        %v323 = vand.u32 %v307, 65535
        %v324 = vand.u32 %v308, 65535
        %v325 = vand.u32 %v309, 65535
        %v326 = vand.u32 %v310, 65535
        %v327 = vand.u32 %v311, 65535
        %v328 = vxor.u32 %v280, %v312
        %v329 = vxor.u32 %v281, %v313
        %v330 = vxor.u32 %v282, %v314
        %v331 = vxor.u32 %v283, %v315
        %v332 = vxor.u32 %v284, %v316
        %v333 = vxor.u32 %v285, %v317
        %v334 = vxor.u32 %v286, %v318
        %v335 = vxor.u32 %v287, %v319
        %v336 = vxor.u32 %v288, %v320
        %v337 = vxor.u32 %v289, %v321
        %v338 = vxor.u32 %v290, %v322
        %v339 = vxor.u32 %v291, %v323
        %v340 = vxor.u32 %v292, %v324
        %v341 = vxor.u32 %v293, %v325
        %v342 = vxor.u32 %v294, %v326
        %v343 = vxor.u32 %v295, %v327
        %v344 = vmul.u32 %v328, 2146121005
        %v345 = vmul.u32 %v329, 2146121005
        %v346 = vmul.u32 %v330, 2146121005
        %v347 = vmul.u32 %v331, 2146121005
        %v348 = vmul.u32 %v332, 2146121005
        %v349 = vmul.u32 %v333, 2146121005
        %v350 = vmul.u32 %v334, 2146121005
        %v351 = vmul.u32 %v335, 2146121005
        %v352 = vmul.u32 %v336, 2146121005
        %v353 = vmul.u32 %v337, 2146121005
        %v354 = vmul.u32 %v338, 2146121005
        %v355 = vmul.u32 %v339, 2146121005
        %v356 = vmul.u32 %v340, 2146121005
        %v357 = vmul.u32 %v341, 2146121005
        %v358 = vmul.u32 %v342, 2146121005
        %v359 = vmul.u32 %v343, 2146121005
        %v360 = vshra.s32 %v344, 15
        %v361 = vshra.s32 %v345, 15
        %v362 = vshra.s32 %v346, 15
        %v363 = vshra.s32 %v347, 15
        %v364 = vshra.s32 %v348, 15
        %v365 = vshra.s32 %v349, 15
        %v366 = vshra.s32 %v350, 15
        %v367 = vshra.s32 %v351, 15
        %v368 = vshra.s32 %v352, 15
        %v369 = vshra.s32 %v353, 15
        %v370 = vshra.s32 %v354, 15
        %v371 = vshra.s32 %v355, 15
        %v372 = vshra.s32 %v356, 15
        %v373 = vshra.s32 %v357, 15
        %v374 = vshra.s32 %v358, 15
        %v375 = vshra.s32 %v359, 15
        %v376 = vand.u32 %v360, 131071
        %v377 = vand.u32 %v361, 131071
        %v378 = vand.u32 %v362, 131071
        %v379 = vand.u32 %v363, 131071
        %v380 = vand.u32 %v364, 131071
        %v381 = vand.u32 %v365, 131071
        %v382 = vand.u32 %v366, 131071
        %v383 = vand.u32 %v367, 131071
        %v384 = vand.u32 %v368, 131071
        %v385 = vand.u32 %v369, 131071
        %v386 = vand.u32 %v370, 131071
        %v387 = vand.u32 %v371, 131071
        %v388 = vand.u32 %v372, 131071
        %v389 = vand.u32 %v373, 131071
        %v390 = vand.u32 %v374, 131071
        %v391 = vand.u32 %v375, 131071
        %v392 = vxor.u32 %v344, %v376
        %v393 = vxor.u32 %v345, %v377
        %v394 = vxor.u32 %v346, %v378
        %v395 = vxor.u32 %v347, %v379
        %v396 = vxor.u32 %v348, %v380
        %v397 = vxor.u32 %v349, %v381
        %v398 = vxor.u32 %v350, %v382
        %v399 = vxor.u32 %v351, %v383
        %v400 = vxor.u32 %v352, %v384
        %v401 = vxor.u32 %v353, %v385
        %v402 = vxor.u32 %v354, %v386
        %v403 = vxor.u32 %v355, %v387
        %v404 = vxor.u32 %v356, %v388
        %v405 = vxor.u32 %v357, %v389
        %v406 = vxor.u32 %v358, %v390
        %v407 = vxor.u32 %v359, %v391
        %v408 = vmul.u32 %v392, 2221713035
        %v409 = vmul.u32 %v393, 2221713035
        %v410 = vmul.u32 %v394, 2221713035
        %v411 = vmul.u32 %v395, 2221713035
        %v412 = vmul.u32 %v396, 2221713035
        %v413 = vmul.u32 %v397, 2221713035
        %v414 = vmul.u32 %v398, 2221713035
        %v415 = vmul.u32 %v399, 2221713035
        %v416 = vmul.u32 %v400, 2221713035
        %v417 = vmul.u32 %v401, 2221713035
        %v418 = vmul.u32 %v402, 2221713035
        %v419 = vmul.u32 %v403, 2221713035
        %v420 = vmul.u32 %v404, 2221713035
        %v421 = vmul.u32 %v405, 2221713035
        %v422 = vmul.u32 %v406, 2221713035
        %v423 = vmul.u32 %v407, 2221713035
        %v424 = vshra.s32 %v408, 16
        %v425 = vshra.s32 %v409, 16
        %v426 = vshra.s32 %v410, 16
        %v427 = vshra.s32 %v411, 16
        %v428 = vshra.s32 %v412, 16
        %v429 = vshra.s32 %v413, 16
        %v430 = vshra.s32 %v414, 16
        %v431 = vshra.s32 %v415, 16
        %v432 = vshra.s32 %v416, 16
        %v433 = vshra.s32 %v417, 16
        %v434 = vshra.s32 %v418, 16
        %v435 = vshra.s32 %v419, 16
        %v436 = vshra.s32 %v420, 16
        %v437 = vshra.s32 %v421, 16
        %v438 = vshra.s32 %v422, 16
        %v439 = vshra.s32 %v423, 16
        %v440 = vand.u32 %v424, 65535
        %v441 = vand.u32 %v425, 65535
        %v442 = vand.u32 %v426, 65535
        %v443 = vand.u32 %v427, 65535
        %v444 = vand.u32 %v428, 65535
        %v445 = vand.u32 %v429, 65535
        %v446 = vand.u32 %v430, 65535
        %v447 = vand.u32 %v431, 65535
        %v448 = vand.u32 %v432, 65535
        %v449 = vand.u32 %v433, 65535
        %v450 = vand.u32 %v434, 65535
        %v451 = vand.u32 %v435, 65535
        %v452 = vand.u32 %v436, 65535
        %v453 = vand.u32 %v437, 65535
        %v454 = vand.u32 %v438, 65535
        %v455 = vand.u32 %v439, 65535
        %v456 = vxor.u32 %v408, %v440
        %v457 = vxor.u32 %v409, %v441
        %v458 = vxor.u32 %v410, %v442
        %v459 = vxor.u32 %v411, %v443
        %v460 = vxor.u32 %v412, %v444
        %v461 = vxor.u32 %v413, %v445
        %v462 = vxor.u32 %v414, %v446
        %v463 = vxor.u32 %v415, %v447
        %v464 = vxor.u32 %v416, %v448
        %v465 = vxor.u32 %v417, %v449
        %v466 = vxor.u32 %v418, %v450
        %v467 = vxor.u32 %v419, %v451
        %v468 = vxor.u32 %v420, %v452
        %v469 = vxor.u32 %v421, %v453
        %v470 = vxor.u32 %v422, %v454
        %v471 = vxor.u32 %v423, %v455
        %v472 = vshra.s32 %v456, 16
        %v473 = vshra.s32 %v457, 16
        %v474 = vshra.s32 %v458, 16
        %v475 = vshra.s32 %v459, 16
        %v476 = vshra.s32 %v460, 16
        %v477 = vshra.s32 %v461, 16
        %v478 = vshra.s32 %v462, 16
        %v479 = vshra.s32 %v463, 16
        %v480 = vshra.s32 %v464, 16
        %v481 = vshra.s32 %v465, 16
        %v482 = vshra.s32 %v466, 16
        %v483 = vshra.s32 %v467, 16
        %v484 = vshra.s32 %v468, 16
        %v485 = vshra.s32 %v469, 16
        %v486 = vshra.s32 %v470, 16
        %v487 = vshra.s32 %v471, 16
        %v488 = vand.u32 %v472, 65535
        %v489 = vand.u32 %v473, 65535
        %v490 = vand.u32 %v474, 65535
        %v491 = vand.u32 %v475, 65535
        %v492 = vand.u32 %v476, 65535
        %v493 = vand.u32 %v477, 65535
        %v494 = vand.u32 %v478, 65535
        %v495 = vand.u32 %v479, 65535
        %v496 = vand.u32 %v480, 65535
        %v497 = vand.u32 %v481, 65535
        %v498 = vand.u32 %v482, 65535
        %v499 = vand.u32 %v483, 65535
        %v500 = vand.u32 %v484, 65535
        %v501 = vand.u32 %v485, 65535
        %v502 = vand.u32 %v486, 65535
        %v503 = vand.u32 %v487, 65535
        %v504 = vxor.u32 %v456, %v488
        %v505 = vxor.u32 %v457, %v489
        %v506 = vxor.u32 %v458, %v490
        %v507 = vxor.u32 %v459, %v491
        %v508 = vxor.u32 %v460, %v492
        %v509 = vxor.u32 %v461, %v493
        %v510 = vxor.u32 %v462, %v494
        %v511 = vxor.u32 %v463, %v495
        %v512 = vxor.u32 %v464, %v496
        %v513 = vxor.u32 %v465, %v497
        %v514 = vxor.u32 %v466, %v498
        %v515 = vxor.u32 %v467, %v499
        %v516 = vxor.u32 %v468, %v500
        %v517 = vxor.u32 %v469, %v501
        %v518 = vxor.u32 %v470, %v502
        %v519 = vxor.u32 %v471, %v503
        %v520 = vmul.u32 %v504, 2146121005
        %v521 = vmul.u32 %v505, 2146121005
        %v522 = vmul.u32 %v506, 2146121005
        %v523 = vmul.u32 %v507, 2146121005
        %v524 = vmul.u32 %v508, 2146121005
        %v525 = vmul.u32 %v509, 2146121005
        %v526 = vmul.u32 %v510, 2146121005
        %v527 = vmul.u32 %v511, 2146121005
        %v528 = vmul.u32 %v512, 2146121005
        %v529 = vmul.u32 %v513, 2146121005
        %v530 = vmul.u32 %v514, 2146121005
        %v531 = vmul.u32 %v515, 2146121005
        %v532 = vmul.u32 %v516, 2146121005
        %v533 = vmul.u32 %v517, 2146121005
        %v534 = vmul.u32 %v518, 2146121005
        %v535 = vmul.u32 %v519, 2146121005
        %v536 = vshra.s32 %v520, 15
        %v537 = vshra.s32 %v521, 15
        %v538 = vshra.s32 %v522, 15
        %v539 = vshra.s32 %v523, 15
        %v540 = vshra.s32 %v524, 15
        %v541 = vshra.s32 %v525, 15
        %v542 = vshra.s32 %v526, 15
        %v543 = vshra.s32 %v527, 15
        %v544 = vshra.s32 %v528, 15
        %v545 = vshra.s32 %v529, 15
        %v546 = vshra.s32 %v530, 15
        %v547 = vshra.s32 %v531, 15
        %v548 = vshra.s32 %v532, 15
        %v549 = vshra.s32 %v533, 15
        %v550 = vshra.s32 %v534, 15
        %v551 = vshra.s32 %v535, 15
        %v552 = vand.u32 %v536, 131071
        %v553 = vand.u32 %v537, 131071
        %v554 = vand.u32 %v538, 131071
        %v555 = vand.u32 %v539, 131071
        %v556 = vand.u32 %v540, 131071
        %v557 = vand.u32 %v541, 131071
        %v558 = vand.u32 %v542, 131071
        %v559 = vand.u32 %v543, 131071
        %v560 = vand.u32 %v544, 131071
        %v561 = vand.u32 %v545, 131071
        %v562 = vand.u32 %v546, 131071
        %v563 = vand.u32 %v547, 131071
        %v564 = vand.u32 %v548, 131071
        %v565 = vand.u32 %v549, 131071
        %v566 = vand.u32 %v550, 131071
        %v567 = vand.u32 %v551, 131071
        %v568 = vxor.u32 %v520, %v552
        %v569 = vxor.u32 %v521, %v553
        %v570 = vxor.u32 %v522, %v554
        %v571 = vxor.u32 %v523, %v555
        %v572 = vxor.u32 %v524, %v556
        %v573 = vxor.u32 %v525, %v557
        %v574 = vxor.u32 %v526, %v558
        %v575 = vxor.u32 %v527, %v559
        %v576 = vxor.u32 %v528, %v560
        %v577 = vxor.u32 %v529, %v561
        %v578 = vxor.u32 %v530, %v562
        %v579 = vxor.u32 %v531, %v563
        %v580 = vxor.u32 %v532, %v564
        %v581 = vxor.u32 %v533, %v565
        %v582 = vxor.u32 %v534, %v566
        %v583 = vxor.u32 %v535, %v567
        %v584 = vmul.u32 %v568, 2221713035
        %v585 = vmul.u32 %v569, 2221713035
        %v586 = vmul.u32 %v570, 2221713035
        %v587 = vmul.u32 %v571, 2221713035
        %v588 = vmul.u32 %v572, 2221713035
        %v589 = vmul.u32 %v573, 2221713035
        %v590 = vmul.u32 %v574, 2221713035
        %v591 = vmul.u32 %v575, 2221713035
        %v592 = vmul.u32 %v576, 2221713035
        %v593 = vmul.u32 %v577, 2221713035
        %v594 = vmul.u32 %v578, 2221713035
        %v595 = vmul.u32 %v579, 2221713035
        %v596 = vmul.u32 %v580, 2221713035
        %v597 = vmul.u32 %v581, 2221713035
        %v598 = vmul.u32 %v582, 2221713035
        %v599 = vmul.u32 %v583, 2221713035
        %v600 = vshra.s32 %v584, 16
        %v601 = vshra.s32 %v585, 16
        %v602 = vshra.s32 %v586, 16
        %v603 = vshra.s32 %v587, 16
        %v604 = vshra.s32 %v588, 16
        %v605 = vshra.s32 %v589, 16
        %v606 = vshra.s32 %v590, 16
        %v607 = vshra.s32 %v591, 16
        %v608 = vshra.s32 %v592, 16
        %v609 = vshra.s32 %v593, 16
        %v610 = vshra.s32 %v594, 16
        %v611 = vshra.s32 %v595, 16
        %v612 = vshra.s32 %v596, 16
        %v613 = vshra.s32 %v597, 16
        %v614 = vshra.s32 %v598, 16
        %v615 = vshra.s32 %v599, 16
        %v616 = vand.u32 %v600, 65535
        %v617 = vand.u32 %v601, 65535
        %v618 = vand.u32 %v602, 65535
        %v619 = vand.u32 %v603, 65535
        %v620 = vand.u32 %v604, 65535
        %v621 = vand.u32 %v605, 65535
        %v622 = vand.u32 %v606, 65535
        %v623 = vand.u32 %v607, 65535
        %v624 = vand.u32 %v608, 65535
        %v625 = vand.u32 %v609, 65535
        %v626 = vand.u32 %v610, 65535
        %v627 = vand.u32 %v611, 65535
        %v628 = vand.u32 %v612, 65535
        %v629 = vand.u32 %v613, 65535
        %v630 = vand.u32 %v614, 65535
        %v631 = vand.u32 %v615, 65535
        %v632 = vxor.u32 %v584, %v616
        %v633 = vxor.u32 %v585, %v617
        %v634 = vxor.u32 %v586, %v618
        %v635 = vxor.u32 %v587, %v619
        %v636 = vxor.u32 %v588, %v620
        %v637 = vxor.u32 %v589, %v621
        %v638 = vxor.u32 %v590, %v622
        %v639 = vxor.u32 %v591, %v623
        %v640 = vxor.u32 %v592, %v624
        %v641 = vxor.u32 %v593, %v625
        %v642 = vxor.u32 %v594, %v626
        %v643 = vxor.u32 %v595, %v627
        %v644 = vxor.u32 %v596, %v628
        %v645 = vxor.u32 %v597, %v629
        %v646 = vxor.u32 %v598, %v630
        %v647 = vxor.u32 %v599, %v631
        %v648 = vand.u32 %v632, 8388607
        %v649 = vand.u32 %v633, 8388607
        %v650 = vand.u32 %v634, 8388607
        %v651 = vand.u32 %v635, 8388607
        %v652 = vand.u32 %v636, 8388607
        %v653 = vand.u32 %v637, 8388607
        %v654 = vand.u32 %v638, 8388607
        %v655 = vand.u32 %v639, 8388607
        %v656 = vand.u32 %v640, 8388607
        %v657 = vand.u32 %v641, 8388607
        %v658 = vand.u32 %v642, 8388607
        %v659 = vand.u32 %v643, 8388607
        %v660 = vand.u32 %v644, 8388607
        %v661 = vand.u32 %v645, 8388607
        %v662 = vand.u32 %v646, 8388607
        %v663 = vand.u32 %v647, 8388607
        %v664 = vcvt.s32.f32 %v648
        %v665 = vcvt.s32.f32 %v649
        %v666 = vcvt.s32.f32 %v650
        %v667 = vcvt.s32.f32 %v651
        %v668 = vcvt.s32.f32 %v652
        %v669 = vcvt.s32.f32 %v653
        %v670 = vcvt.s32.f32 %v654
        %v671 = vcvt.s32.f32 %v655
        %v672 = vcvt.s32.f32 %v656
        %v673 = vcvt.s32.f32 %v657
        %v674 = vcvt.s32.f32 %v658
        %v675 = vcvt.s32.f32 %v659
        %v676 = vcvt.s32.f32 %v660
        %v677 = vcvt.s32.f32 %v661
        %v678 = vcvt.s32.f32 %v662
        %v679 = vcvt.s32.f32 %v663
        %v680 = vadd.f32 %v664, 0.5
        %v681 = vadd.f32 %v665, 0.5
        %v682 = vadd.f32 %v666, 0.5
        %v683 = vadd.f32 %v667, 0.5
        %v684 = vadd.f32 %v668, 0.5
        %v685 = vadd.f32 %v669, 0.5
        %v686 = vadd.f32 %v670, 0.5
        %v687 = vadd.f32 %v671, 0.5
        %v688 = vadd.f32 %v672, 0.5
        %v689 = vadd.f32 %v673, 0.5
        %v690 = vadd.f32 %v674, 0.5
        %v691 = vadd.f32 %v675, 0.5
        %v692 = vadd.f32 %v676, 0.5
        %v693 = vadd.f32 %v677, 0.5
        %v694 = vadd.f32 %v678, 0.5
        %v695 = vadd.f32 %v679, 0.5
        %v696 = vmul.f32 %v680, 1.1920929e-07
        %v697 = vmul.f32 %v681, 1.1920929e-07
        %v698 = vmul.f32 %v682, 1.1920929e-07
        %v699 = vmul.f32 %v683, 1.1920929e-07
        %v700 = vmul.f32 %v684, 1.1920929e-07
        %v701 = vmul.f32 %v685, 1.1920929e-07
        %v702 = vmul.f32 %v686, 1.1920929e-07
        %v703 = vmul.f32 %v687, 1.1920929e-07
        %v704 = vmul.f32 %v688, 1.1920929e-07
        %v705 = vmul.f32 %v689, 1.1920929e-07
        %v706 = vmul.f32 %v690, 1.1920929e-07
        %v707 = vmul.f32 %v691, 1.1920929e-07
        %v708 = vmul.f32 %v692, 1.1920929e-07
        %v709 = vmul.f32 %v693, 1.1920929e-07
        %v710 = vmul.f32 %v694, 1.1920929e-07
        %v711 = vmul.f32 %v695, 1.1920929e-07
        %v712 = vsub.f32 %v696, 0.5
        %v713 = vsub.f32 %v697, 0.5
        %v714 = vsub.f32 %v698, 0.5
        %v715 = vsub.f32 %v699, 0.5
        %v716 = vsub.f32 %v700, 0.5
        %v717 = vsub.f32 %v701, 0.5
        %v718 = vsub.f32 %v702, 0.5
        %v719 = vsub.f32 %v703, 0.5
        %v720 = vsub.f32 %v704, 0.5
        %v721 = vsub.f32 %v705, 0.5
        %v722 = vsub.f32 %v706, 0.5
        %v723 = vsub.f32 %v707, 0.5
        %v724 = vsub.f32 %v708, 0.5
        %v725 = vsub.f32 %v709, 0.5
        %v726 = vsub.f32 %v710, 0.5
        %v727 = vsub.f32 %v711, 0.5
        %v728 = vmul.f32 %v712, %v712
        %v729 = vmul.f32 %v713, %v713
        %v730 = vmul.f32 %v714, %v714
        %v731 = vmul.f32 %v715, %v715
        %v732 = vmul.f32 %v716, %v716
        %v733 = vmul.f32 %v717, %v717
        %v734 = vmul.f32 %v718, %v718
        %v735 = vmul.f32 %v719, %v719
        %v736 = vmul.f32 %v720, %v720
        %v737 = vmul.f32 %v721, %v721
        %v738 = vmul.f32 %v722, %v722
        %v739 = vmul.f32 %v723, %v723
        %v740 = vmul.f32 %v724, %v724
        %v741 = vmul.f32 %v725, %v725
        %v742 = vmul.f32 %v726, %v726
        %v743 = vmul.f32 %v727, %v727
        %v744 = vmul.f32 %v728, -39.69683
        %v745 = vmul.f32 %v729, -39.69683
        %v746 = vmul.f32 %v730, -39.69683
        %v747 = vmul.f32 %v731, -39.69683
        %v748 = vmul.f32 %v732, -39.69683
        %v749 = vmul.f32 %v733, -39.69683
        %v750 = vmul.f32 %v734, -39.69683
        %v751 = vmul.f32 %v735, -39.69683
        %v752 = vmul.f32 %v736, -39.69683
        %v753 = vmul.f32 %v737, -39.69683
        %v754 = vmul.f32 %v738, -39.69683
        %v755 = vmul.f32 %v739, -39.69683
        %v756 = vmul.f32 %v740, -39.69683
        %v757 = vmul.f32 %v741, -39.69683
        %v758 = vmul.f32 %v742, -39.69683
        %v759 = vmul.f32 %v743, -39.69683
        %v760 = vadd.f32 %v744, 220.9461
        %v761 = vadd.f32 %v745, 220.9461
        %v762 = vadd.f32 %v746, 220.9461
        %v763 = vadd.f32 %v747, 220.9461
        %v764 = vadd.f32 %v748, 220.9461
        %v765 = vadd.f32 %v749, 220.9461
        %v766 = vadd.f32 %v750, 220.9461
        %v767 = vadd.f32 %v751, 220.9461
        %v768 = vadd.f32 %v752, 220.9461
        %v769 = vadd.f32 %v753, 220.9461
        %v770 = vadd.f32 %v754, 220.9461
        %v771 = vadd.f32 %v755, 220.9461
        %v772 = vadd.f32 %v756, 220.9461
        %v773 = vadd.f32 %v757, 220.9461
        %v774 = vadd.f32 %v758, 220.9461
        %v775 = vadd.f32 %v759, 220.9461
        %v776 = vmul.f32 %v760, %v728
        %v777 = vmul.f32 %v761, %v729
        %v778 = vmul.f32 %v762, %v730
        %v779 = vmul.f32 %v763, %v731
        %v780 = vmul.f32 %v764, %v732
        %v781 = vmul.f32 %v765, %v733
        %v782 = vmul.f32 %v766, %v734
        %v783 = vmul.f32 %v767, %v735
        %v784 = vmul.f32 %v768, %v736
        %v785 = vmul.f32 %v769, %v737
        %v786 = vmul.f32 %v770, %v738
        %v787 = vmul.f32 %v771, %v739
        %v788 = vmul.f32 %v772, %v740
        %v789 = vmul.f32 %v773, %v741
        %v790 = vmul.f32 %v774, %v742
        %v791 = vmul.f32 %v775, %v743
        %v792 = vadd.f32 %v776, -275.9285
        %v793 = vadd.f32 %v777, -275.9285
        %v794 = vadd.f32 %v778, -275.9285
        %v795 = vadd.f32 %v779, -275.9285
        %v796 = vadd.f32 %v780, -275.9285
        %v797 = vadd.f32 %v781, -275.9285
        %v798 = vadd.f32 %v782, -275.9285
        %v799 = vadd.f32 %v783, -275.9285
        %v800 = vadd.f32 %v784, -275.9285
        %v801 = vadd.f32 %v785, -275.9285
        %v802 = vadd.f32 %v786, -275.9285
        %v803 = vadd.f32 %v787, -275.9285
        %v804 = vadd.f32 %v788, -275.9285
        %v805 = vadd.f32 %v789, -275.9285
        %v806 = vadd.f32 %v790, -275.9285
        %v807 = vadd.f32 %v791, -275.9285
        %v808 = vmul.f32 %v792, %v728
        %v809 = vmul.f32 %v793, %v729
        %v810 = vmul.f32 %v794, %v730
        %v811 = vmul.f32 %v795, %v731
        %v812 = vmul.f32 %v796, %v732
        %v813 = vmul.f32 %v797, %v733
        %v814 = vmul.f32 %v798, %v734
        %v815 = vmul.f32 %v799, %v735
        %v816 = vmul.f32 %v800, %v736
        %v817 = vmul.f32 %v801, %v737
        %v818 = vmul.f32 %v802, %v738
        %v819 = vmul.f32 %v803, %v739
        %v820 = vmul.f32 %v804, %v740
        %v821 = vmul.f32 %v805, %v741
        %v822 = vmul.f32 %v806, %v742
        %v823 = vmul.f32 %v807, %v743
        %v824 = vadd.f32 %v808, 138.35776
        %v825 = vadd.f32 %v809, 138.35776
        %v826 = vadd.f32 %v810, 138.35776
        %v827 = vadd.f32 %v811, 138.35776
        %v828 = vadd.f32 %v812, 138.35776
        %v829 = vadd.f32 %v813, 138.35776
        %v830 = vadd.f32 %v814, 138.35776
        %v831 = vadd.f32 %v815, 138.35776
        %v832 = vadd.f32 %v816, 138.35776
        %v833 = vadd.f32 %v817, 138.35776
        %v834 = vadd.f32 %v818, 138.35776
        %v835 = vadd.f32 %v819, 138.35776
        %v836 = vadd.f32 %v820, 138.35776
        %v837 = vadd.f32 %v821, 138.35776
        %v838 = vadd.f32 %v822, 138.35776
        %v839 = vadd.f32 %v823, 138.35776
        %v840 = vmul.f32 %v824, %v728
        %v841 = vmul.f32 %v825, %v729
        %v842 = vmul.f32 %v826, %v730
        %v843 = vmul.f32 %v827, %v731
        %v844 = vmul.f32 %v828, %v732
        %v845 = vmul.f32 %v829, %v733
        %v846 = vmul.f32 %v830, %v734
        %v847 = vmul.f32 %v831, %v735
        %v848 = vmul.f32 %v832, %v736
        %v849 = vmul.f32 %v833, %v737
        %v850 = vmul.f32 %v834, %v738
        %v851 = vmul.f32 %v835, %v739
        %v852 = vmul.f32 %v836, %v740
        %v853 = vmul.f32 %v837, %v741
        %v854 = vmul.f32 %v838, %v742
        %v855 = vmul.f32 %v839, %v743
        %v856 = vadd.f32 %v840, -30.664799
        %v857 = vadd.f32 %v841, -30.664799
        %v858 = vadd.f32 %v842, -30.664799
        %v859 = vadd.f32 %v843, -30.664799
        %v860 = vadd.f32 %v844, -30.664799
        %v861 = vadd.f32 %v845, -30.664799
        %v862 = vadd.f32 %v846, -30.664799
        %v863 = vadd.f32 %v847, -30.664799
        %v864 = vadd.f32 %v848, -30.664799
        %v865 = vadd.f32 %v849, -30.664799
        %v866 = vadd.f32 %v850, -30.664799
        %v867 = vadd.f32 %v851, -30.664799
        %v868 = vadd.f32 %v852, -30.664799
        %v869 = vadd.f32 %v853, -30.664799
        %v870 = vadd.f32 %v854, -30.664799
        %v871 = vadd.f32 %v855, -30.664799
        %v872 = vmul.f32 %v856, %v728
        %v873 = vmul.f32 %v857, %v729
        %v874 = vmul.f32 %v858, %v730
        %v875 = vmul.f32 %v859, %v731
        %v876 = vmul.f32 %v860, %v732
        %v877 = vmul.f32 %v861, %v733
        %v878 = vmul.f32 %v862, %v734
        %v879 = vmul.f32 %v863, %v735
        %v880 = vmul.f32 %v864, %v736
        %v881 = vmul.f32 %v865, %v737
        %v882 = vmul.f32 %v866, %v738
        %v883 = vmul.f32 %v867, %v739
        %v884 = vmul.f32 %v868, %v740
        %v885 = vmul.f32 %v869, %v741
        %v886 = vmul.f32 %v870, %v742
        %v887 = vmul.f32 %v871, %v743
        %v888 = vadd.f32 %v872, 2.5066283
        %v889 = vadd.f32 %v873, 2.5066283
        %v890 = vadd.f32 %v874, 2.5066283
        %v891 = vadd.f32 %v875, 2.5066283
        %v892 = vadd.f32 %v876, 2.5066283
        %v893 = vadd.f32 %v877, 2.5066283
        %v894 = vadd.f32 %v878, 2.5066283
        %v895 = vadd.f32 %v879, 2.5066283
        %v896 = vadd.f32 %v880, 2.5066283
        %v897 = vadd.f32 %v881, 2.5066283
        %v898 = vadd.f32 %v882, 2.5066283
        %v899 = vadd.f32 %v883, 2.5066283
        %v900 = vadd.f32 %v884, 2.5066283
        %v901 = vadd.f32 %v885, 2.5066283
        %v902 = vadd.f32 %v886, 2.5066283
        %v903 = vadd.f32 %v887, 2.5066283
        %v904 = vmul.f32 %v728, -54.476097
        %v905 = vmul.f32 %v729, -54.476097
        %v906 = vmul.f32 %v730, -54.476097
        %v907 = vmul.f32 %v731, -54.476097
        %v908 = vmul.f32 %v732, -54.476097
        %v909 = vmul.f32 %v733, -54.476097
        %v910 = vmul.f32 %v734, -54.476097
        %v911 = vmul.f32 %v735, -54.476097
        %v912 = vmul.f32 %v736, -54.476097
        %v913 = vmul.f32 %v737, -54.476097
        %v914 = vmul.f32 %v738, -54.476097
        %v915 = vmul.f32 %v739, -54.476097
        %v916 = vmul.f32 %v740, -54.476097
        %v917 = vmul.f32 %v741, -54.476097
        %v918 = vmul.f32 %v742, -54.476097
        %v919 = vmul.f32 %v743, -54.476097
        %v920 = vadd.f32 %v904, 161.58583
        %v921 = vadd.f32 %v905, 161.58583
        %v922 = vadd.f32 %v906, 161.58583
        %v923 = vadd.f32 %v907, 161.58583
        %v924 = vadd.f32 %v908, 161.58583
        %v925 = vadd.f32 %v909, 161.58583
        %v926 = vadd.f32 %v910, 161.58583
        %v927 = vadd.f32 %v911, 161.58583
        %v928 = vadd.f32 %v912, 161.58583
        %v929 = vadd.f32 %v913, 161.58583
        %v930 = vadd.f32 %v914, 161.58583
        %v931 = vadd.f32 %v915, 161.58583
        %v932 = vadd.f32 %v916, 161.58583
        %v933 = vadd.f32 %v917, 161.58583
        %v934 = vadd.f32 %v918, 161.58583
        %v935 = vadd.f32 %v919, 161.58583
        %v936 = vmul.f32 %v920, %v728
        %v937 = vmul.f32 %v921, %v729
        %v938 = vmul.f32 %v922, %v730
        %v939 = vmul.f32 %v923, %v731
        %v940 = vmul.f32 %v924, %v732
        %v941 = vmul.f32 %v925, %v733
        %v942 = vmul.f32 %v926, %v734
        %v943 = vmul.f32 %v927, %v735
        %v944 = vmul.f32 %v928, %v736
        %v945 = vmul.f32 %v929, %v737
        %v946 = vmul.f32 %v930, %v738
        %v947 = vmul.f32 %v931, %v739
        %v948 = vmul.f32 %v932, %v740
        %v949 = vmul.f32 %v933, %v741
        %v950 = vmul.f32 %v934, %v742
        %v951 = vmul.f32 %v935, %v743
        %v952 = vadd.f32 %v936, -155.69897
        %v953 = vadd.f32 %v937, -155.69897
        %v954 = vadd.f32 %v938, -155.69897
        %v955 = vadd.f32 %v939, -155.69897
        %v956 = vadd.f32 %v940, -155.69897
        %v957 = vadd.f32 %v941, -155.69897
        %v958 = vadd.f32 %v942, -155.69897
        %v959 = vadd.f32 %v943, -155.69897
        %v960 = vadd.f32 %v944, -155.69897
        %v961 = vadd.f32 %v945, -155.69897
        %v962 = vadd.f32 %v946, -155.69897
        %v963 = vadd.f32 %v947, -155.69897
        %v964 = vadd.f32 %v948, -155.69897
        %v965 = vadd.f32 %v949, -155.69897
        %v966 = vadd.f32 %v950, -155.69897
        %v967 = vadd.f32 %v951, -155.69897
        %v968 = vmul.f32 %v952, %v728
        %v969 = vmul.f32 %v953, %v729
        %v970 = vmul.f32 %v954, %v730
        %v971 = vmul.f32 %v955, %v731
        %v972 = vmul.f32 %v956, %v732
        %v973 = vmul.f32 %v957, %v733
        %v974 = vmul.f32 %v958, %v734
        %v975 = vmul.f32 %v959, %v735
        %v976 = vmul.f32 %v960, %v736
        %v977 = vmul.f32 %v961, %v737
        %v978 = vmul.f32 %v962, %v738
        %v979 = vmul.f32 %v963, %v739
        %v980 = vmul.f32 %v964, %v740
        %v981 = vmul.f32 %v965, %v741
        %v982 = vmul.f32 %v966, %v742
        %v983 = vmul.f32 %v967, %v743
        %v984 = vadd.f32 %v968, 66.801315
        %v985 = vadd.f32 %v969, 66.801315
        %v986 = vadd.f32 %v970, 66.801315
        %v987 = vadd.f32 %v971, 66.801315
        %v988 = vadd.f32 %v972, 66.801315
        %v989 = vadd.f32 %v973, 66.801315
        %v990 = vadd.f32 %v974, 66.801315
        %v991 = vadd.f32 %v975, 66.801315
        %v992 = vadd.f32 %v976, 66.801315
        %v993 = vadd.f32 %v977, 66.801315
        %v994 = vadd.f32 %v978, 66.801315
        %v995 = vadd.f32 %v979, 66.801315
        %v996 = vadd.f32 %v980, 66.801315
        %v997 = vadd.f32 %v981, 66.801315
        %v998 = vadd.f32 %v982, 66.801315
        %v999 = vadd.f32 %v983, 66.801315
        %v1000 = vmul.f32 %v984, %v728
        %v1001 = vmul.f32 %v985, %v729
        %v1002 = vmul.f32 %v986, %v730
        %v1003 = vmul.f32 %v987, %v731
        %v1004 = vmul.f32 %v988, %v732
        %v1005 = vmul.f32 %v989, %v733
        %v1006 = vmul.f32 %v990, %v734
        %v1007 = vmul.f32 %v991, %v735
        %v1008 = vmul.f32 %v992, %v736
        %v1009 = vmul.f32 %v993, %v737
        %v1010 = vmul.f32 %v994, %v738
        %v1011 = vmul.f32 %v995, %v739
        %v1012 = vmul.f32 %v996, %v740
        %v1013 = vmul.f32 %v997, %v741
        %v1014 = vmul.f32 %v998, %v742
        %v1015 = vmul.f32 %v999, %v743
        %v1016 = vadd.f32 %v1000, -13.280682
        %v1017 = vadd.f32 %v1001, -13.280682
        %v1018 = vadd.f32 %v1002, -13.280682
        %v1019 = vadd.f32 %v1003, -13.280682
        %v1020 = vadd.f32 %v1004, -13.280682
        %v1021 = vadd.f32 %v1005, -13.280682
        %v1022 = vadd.f32 %v1006, -13.280682
        %v1023 = vadd.f32 %v1007, -13.280682
        %v1024 = vadd.f32 %v1008, -13.280682
        %v1025 = vadd.f32 %v1009, -13.280682
        %v1026 = vadd.f32 %v1010, -13.280682
        %v1027 = vadd.f32 %v1011, -13.280682
        %v1028 = vadd.f32 %v1012, -13.280682
        %v1029 = vadd.f32 %v1013, -13.280682
        %v1030 = vadd.f32 %v1014, -13.280682
        %v1031 = vadd.f32 %v1015, -13.280682
        %v1032 = vmul.f32 %v1016, %v728
        %v1033 = vmul.f32 %v1017, %v729
        %v1034 = vmul.f32 %v1018, %v730
        %v1035 = vmul.f32 %v1019, %v731
        %v1036 = vmul.f32 %v1020, %v732
        %v1037 = vmul.f32 %v1021, %v733
        %v1038 = vmul.f32 %v1022, %v734
        %v1039 = vmul.f32 %v1023, %v735
        %v1040 = vmul.f32 %v1024, %v736
        %v1041 = vmul.f32 %v1025, %v737
        %v1042 = vmul.f32 %v1026, %v738
        %v1043 = vmul.f32 %v1027, %v739
        %v1044 = vmul.f32 %v1028, %v740
        %v1045 = vmul.f32 %v1029, %v741
        %v1046 = vmul.f32 %v1030, %v742
        %v1047 = vmul.f32 %v1031, %v743
        %v1048 = vadd.f32 %v1032, 1.0
        %v1049 = vadd.f32 %v1033, 1.0
        %v1050 = vadd.f32 %v1034, 1.0
        %v1051 = vadd.f32 %v1035, 1.0
        %v1052 = vadd.f32 %v1036, 1.0
        %v1053 = vadd.f32 %v1037, 1.0
        %v1054 = vadd.f32 %v1038, 1.0
        %v1055 = vadd.f32 %v1039, 1.0
        %v1056 = vadd.f32 %v1040, 1.0
        %v1057 = vadd.f32 %v1041, 1.0
        %v1058 = vadd.f32 %v1042, 1.0
        %v1059 = vadd.f32 %v1043, 1.0
        %v1060 = vadd.f32 %v1044, 1.0
        %v1061 = vadd.f32 %v1045, 1.0
        %v1062 = vadd.f32 %v1046, 1.0
        %v1063 = vadd.f32 %v1047, 1.0
        %v1064 = vmul.f32 %v712, %v888
        %v1065 = vmul.f32 %v713, %v889
        %v1066 = vmul.f32 %v714, %v890
        %v1067 = vmul.f32 %v715, %v891
        %v1068 = vmul.f32 %v716, %v892
        %v1069 = vmul.f32 %v717, %v893
        %v1070 = vmul.f32 %v718, %v894
        %v1071 = vmul.f32 %v719, %v895
        %v1072 = vmul.f32 %v720, %v896
        %v1073 = vmul.f32 %v721, %v897
        %v1074 = vmul.f32 %v722, %v898
        %v1075 = vmul.f32 %v723, %v899
        %v1076 = vmul.f32 %v724, %v900
        %v1077 = vmul.f32 %v725, %v901
        %v1078 = vmul.f32 %v726, %v902
        %v1079 = vmul.f32 %v727, %v903
        %v1080 = vrcp.pop %v1048
        %v1081 = vmul.f32 %v1048, %v1080
        %v1082 = vsub.f32 1.0, %v1081
        %v1083 = vmul.f32 %v1080, %v1082
        %v1084 = vadd.f32 %v1080, %v1083
        %vm1085 = vweird.f32 %v1048
        %vm1086 = vweird.f32 %v1080
        %vm1087 = vmor %vm1085, %vm1086
        %v1088 = vsel %vm1087, %v1080, %v1084
        %v1089 = vand.u32 2147483647, %v1048
        %vm1090 = vcmp.eq.f32.partialorder %v1089, 8.507059e+37
        %v1091 = vand.u32 %v1048, 2147483648
        %v1092 = vor.u32 1.1754944e-38, %v1091
        %v1093 = vsel %vm1090, %v1092, %v1088
        %v1094 = vmul.f32 %v1064, %v1093
        %v1095 = vrcp.pop %v1049
        %v1096 = vmul.f32 %v1049, %v1095
        %v1097 = vsub.f32 1.0, %v1096
        %v1098 = vmul.f32 %v1095, %v1097
        %v1099 = vadd.f32 %v1095, %v1098
        %vm1100 = vweird.f32 %v1049
        %vm1101 = vweird.f32 %v1095
        %vm1102 = vmor %vm1100, %vm1101
        %v1103 = vsel %vm1102, %v1095, %v1099
        %v1104 = vand.u32 2147483647, %v1049
        %vm1105 = vcmp.eq.f32.partialorder %v1104, 8.507059e+37
        %v1106 = vand.u32 %v1049, 2147483648
        %v1107 = vor.u32 1.1754944e-38, %v1106
        %v1108 = vsel %vm1105, %v1107, %v1103
        %v1109 = vmul.f32 %v1065, %v1108
        %v1110 = vrcp.pop %v1050
        %v1111 = vmul.f32 %v1050, %v1110
        %v1112 = vsub.f32 1.0, %v1111
        %v1113 = vmul.f32 %v1110, %v1112
        %v1114 = vadd.f32 %v1110, %v1113
        %vm1115 = vweird.f32 %v1050
        %vm1116 = vweird.f32 %v1110
        %vm1117 = vmor %vm1115, %vm1116
        %v1118 = vsel %vm1117, %v1110, %v1114
        %v1119 = vand.u32 2147483647, %v1050
        %vm1120 = vcmp.eq.f32.partialorder %v1119, 8.507059e+37
        %v1121 = vand.u32 %v1050, 2147483648
        %v1122 = vor.u32 1.1754944e-38, %v1121
        %v1123 = vsel %vm1120, %v1122, %v1118
        %v1124 = vmul.f32 %v1066, %v1123
        %v1125 = vrcp.pop %v1051
        %v1126 = vmul.f32 %v1051, %v1125
        %v1127 = vsub.f32 1.0, %v1126
        %v1128 = vmul.f32 %v1125, %v1127
        %v1129 = vadd.f32 %v1125, %v1128
        %vm1130 = vweird.f32 %v1051
        %vm1131 = vweird.f32 %v1125
        %vm1132 = vmor %vm1130, %vm1131
        %v1133 = vsel %vm1132, %v1125, %v1129
        %v1134 = vand.u32 2147483647, %v1051
        %vm1135 = vcmp.eq.f32.partialorder %v1134, 8.507059e+37
        %v1136 = vand.u32 %v1051, 2147483648
        %v1137 = vor.u32 1.1754944e-38, %v1136
        %v1138 = vsel %vm1135, %v1137, %v1133
        %v1139 = vmul.f32 %v1067, %v1138
        %v1140 = vrcp.pop %v1052
        %v1141 = vmul.f32 %v1052, %v1140
        %v1142 = vsub.f32 1.0, %v1141
        %v1143 = vmul.f32 %v1140, %v1142
        %v1144 = vadd.f32 %v1140, %v1143
        %vm1145 = vweird.f32 %v1052
        %vm1146 = vweird.f32 %v1140
        %vm1147 = vmor %vm1145, %vm1146
        %v1148 = vsel %vm1147, %v1140, %v1144
        %v1149 = vand.u32 2147483647, %v1052
        %vm1150 = vcmp.eq.f32.partialorder %v1149, 8.507059e+37
        %v1151 = vand.u32 %v1052, 2147483648
        %v1152 = vor.u32 1.1754944e-38, %v1151
        %v1153 = vsel %vm1150, %v1152, %v1148
        %v1154 = vmul.f32 %v1068, %v1153
        %v1155 = vrcp.pop %v1053
        %v1156 = vmul.f32 %v1053, %v1155
        %v1157 = vsub.f32 1.0, %v1156
        %v1158 = vmul.f32 %v1155, %v1157
        %v1159 = vadd.f32 %v1155, %v1158
        %vm1160 = vweird.f32 %v1053
        %vm1161 = vweird.f32 %v1155
        %vm1162 = vmor %vm1160, %vm1161
        %v1163 = vsel %vm1162, %v1155, %v1159
        %v1164 = vand.u32 2147483647, %v1053
        %vm1165 = vcmp.eq.f32.partialorder %v1164, 8.507059e+37
        %v1166 = vand.u32 %v1053, 2147483648
        %v1167 = vor.u32 1.1754944e-38, %v1166
        %v1168 = vsel %vm1165, %v1167, %v1163
        %v1169 = vmul.f32 %v1069, %v1168
        %v1170 = vrcp.pop %v1054
        %v1171 = vmul.f32 %v1054, %v1170
        %v1172 = vsub.f32 1.0, %v1171
        %v1173 = vmul.f32 %v1170, %v1172
        %v1174 = vadd.f32 %v1170, %v1173
        %vm1175 = vweird.f32 %v1054
        %vm1176 = vweird.f32 %v1170
        %vm1177 = vmor %vm1175, %vm1176
        %v1178 = vsel %vm1177, %v1170, %v1174
        %v1179 = vand.u32 2147483647, %v1054
        %vm1180 = vcmp.eq.f32.partialorder %v1179, 8.507059e+37
        %v1181 = vand.u32 %v1054, 2147483648
        %v1182 = vor.u32 1.1754944e-38, %v1181
        %v1183 = vsel %vm1180, %v1182, %v1178
        %v1184 = vmul.f32 %v1070, %v1183
        %v1185 = vrcp.pop %v1055
        %v1186 = vmul.f32 %v1055, %v1185
        %v1187 = vsub.f32 1.0, %v1186
        %v1188 = vmul.f32 %v1185, %v1187
        %v1189 = vadd.f32 %v1185, %v1188
        %vm1190 = vweird.f32 %v1055
        %vm1191 = vweird.f32 %v1185
        %vm1192 = vmor %vm1190, %vm1191
        %v1193 = vsel %vm1192, %v1185, %v1189
        %v1194 = vand.u32 2147483647, %v1055
        %vm1195 = vcmp.eq.f32.partialorder %v1194, 8.507059e+37
        %v1196 = vand.u32 %v1055, 2147483648
        %v1197 = vor.u32 1.1754944e-38, %v1196
        %v1198 = vsel %vm1195, %v1197, %v1193
        %v1199 = vmul.f32 %v1071, %v1198
        %v1200 = vrcp.pop %v1056
        %v1201 = vmul.f32 %v1056, %v1200
        %v1202 = vsub.f32 1.0, %v1201
        %v1203 = vmul.f32 %v1200, %v1202
        %v1204 = vadd.f32 %v1200, %v1203
        %vm1205 = vweird.f32 %v1056
        %vm1206 = vweird.f32 %v1200
        %vm1207 = vmor %vm1205, %vm1206
        %v1208 = vsel %vm1207, %v1200, %v1204
        %v1209 = vand.u32 2147483647, %v1056
        %vm1210 = vcmp.eq.f32.partialorder %v1209, 8.507059e+37
        %v1211 = vand.u32 %v1056, 2147483648
        %v1212 = vor.u32 1.1754944e-38, %v1211
        %v1213 = vsel %vm1210, %v1212, %v1208
        %v1214 = vmul.f32 %v1072, %v1213
        %v1215 = vrcp.pop %v1057
        %v1216 = vmul.f32 %v1057, %v1215
        %v1217 = vsub.f32 1.0, %v1216
        %v1218 = vmul.f32 %v1215, %v1217
        %v1219 = vadd.f32 %v1215, %v1218
        %vm1220 = vweird.f32 %v1057
        %vm1221 = vweird.f32 %v1215
        %vm1222 = vmor %vm1220, %vm1221
        %v1223 = vsel %vm1222, %v1215, %v1219
        %v1224 = vand.u32 2147483647, %v1057
        %vm1225 = vcmp.eq.f32.partialorder %v1224, 8.507059e+37
        %v1226 = vand.u32 %v1057, 2147483648
        %v1227 = vor.u32 1.1754944e-38, %v1226
        %v1228 = vsel %vm1225, %v1227, %v1223
        %v1229 = vmul.f32 %v1073, %v1228
        %v1230 = vrcp.pop %v1058
        %v1231 = vmul.f32 %v1058, %v1230
        %v1232 = vsub.f32 1.0, %v1231
        %v1233 = vmul.f32 %v1230, %v1232
        %v1234 = vadd.f32 %v1230, %v1233
        %vm1235 = vweird.f32 %v1058
        %vm1236 = vweird.f32 %v1230
        %vm1237 = vmor %vm1235, %vm1236
        %v1238 = vsel %vm1237, %v1230, %v1234
        %v1239 = vand.u32 2147483647, %v1058
        %vm1240 = vcmp.eq.f32.partialorder %v1239, 8.507059e+37
        %v1241 = vand.u32 %v1058, 2147483648
        %v1242 = vor.u32 1.1754944e-38, %v1241
        %v1243 = vsel %vm1240, %v1242, %v1238
        %v1244 = vmul.f32 %v1074, %v1243
        %v1245 = vrcp.pop %v1059
        %v1246 = vmul.f32 %v1059, %v1245
        %v1247 = vsub.f32 1.0, %v1246
        %v1248 = vmul.f32 %v1245, %v1247
        %v1249 = vadd.f32 %v1245, %v1248
        %vm1250 = vweird.f32 %v1059
        %vm1251 = vweird.f32 %v1245
        %vm1252 = vmor %vm1250, %vm1251
        %v1253 = vsel %vm1252, %v1245, %v1249
        %v1254 = vand.u32 2147483647, %v1059
        %vm1255 = vcmp.eq.f32.partialorder %v1254, 8.507059e+37
        %v1256 = vand.u32 %v1059, 2147483648
        %v1257 = vor.u32 1.1754944e-38, %v1256
        %v1258 = vsel %vm1255, %v1257, %v1253
        %v1259 = vmul.f32 %v1075, %v1258
        %v1260 = vrcp.pop %v1060
        %v1261 = vmul.f32 %v1060, %v1260
        %v1262 = vsub.f32 1.0, %v1261
        %v1263 = vmul.f32 %v1260, %v1262
        %v1264 = vadd.f32 %v1260, %v1263
        %vm1265 = vweird.f32 %v1060
        %vm1266 = vweird.f32 %v1260
        %vm1267 = vmor %vm1265, %vm1266
        %v1268 = vsel %vm1267, %v1260, %v1264
        %v1269 = vand.u32 2147483647, %v1060
        %vm1270 = vcmp.eq.f32.partialorder %v1269, 8.507059e+37
        %v1271 = vand.u32 %v1060, 2147483648
        %v1272 = vor.u32 1.1754944e-38, %v1271
        %v1273 = vsel %vm1270, %v1272, %v1268
        %v1274 = vmul.f32 %v1076, %v1273
        %v1275 = vrcp.pop %v1061
        %v1276 = vmul.f32 %v1061, %v1275
        %v1277 = vsub.f32 1.0, %v1276
        %v1278 = vmul.f32 %v1275, %v1277
        %v1279 = vadd.f32 %v1275, %v1278
        %vm1280 = vweird.f32 %v1061
        %vm1281 = vweird.f32 %v1275
        %vm1282 = vmor %vm1280, %vm1281
        %v1283 = vsel %vm1282, %v1275, %v1279
        %v1284 = vand.u32 2147483647, %v1061
        %vm1285 = vcmp.eq.f32.partialorder %v1284, 8.507059e+37
        %v1286 = vand.u32 %v1061, 2147483648
        %v1287 = vor.u32 1.1754944e-38, %v1286
        %v1288 = vsel %vm1285, %v1287, %v1283
        %v1289 = vmul.f32 %v1077, %v1288
        %v1290 = vrcp.pop %v1062
        %v1291 = vmul.f32 %v1062, %v1290
        %v1292 = vsub.f32 1.0, %v1291
        %v1293 = vmul.f32 %v1290, %v1292
        %v1294 = vadd.f32 %v1290, %v1293
        %vm1295 = vweird.f32 %v1062
        %vm1296 = vweird.f32 %v1290
        %vm1297 = vmor %vm1295, %vm1296
        %v1298 = vsel %vm1297, %v1290, %v1294
        %v1299 = vand.u32 2147483647, %v1062
        %vm1300 = vcmp.eq.f32.partialorder %v1299, 8.507059e+37
        %v1301 = vand.u32 %v1062, 2147483648
        %v1302 = vor.u32 1.1754944e-38, %v1301
        %v1303 = vsel %vm1300, %v1302, %v1298
        %v1304 = vmul.f32 %v1078, %v1303
        %v1305 = vrcp.pop %v1063
        %v1306 = vmul.f32 %v1063, %v1305
        %v1307 = vsub.f32 1.0, %v1306
        %v1308 = vmul.f32 %v1305, %v1307
        %v1309 = vadd.f32 %v1305, %v1308
        %vm1310 = vweird.f32 %v1063
        %vm1311 = vweird.f32 %v1305
        %vm1312 = vmor %vm1310, %vm1311
        %v1313 = vsel %vm1312, %v1305, %v1309
        %v1314 = vand.u32 2147483647, %v1063
        %vm1315 = vcmp.eq.f32.partialorder %v1314, 8.507059e+37
        %v1316 = vand.u32 %v1063, 2147483648
        %v1317 = vor.u32 1.1754944e-38, %v1316
        %v1318 = vsel %vm1315, %v1317, %v1313
        %v1319 = vmul.f32 %v1079, %v1318
        %v1320 = vsub.f32 1.0, %v696
        %v1321 = vsub.f32 1.0, %v697
        %v1322 = vsub.f32 1.0, %v698
        %v1323 = vsub.f32 1.0, %v699
        %v1324 = vsub.f32 1.0, %v700
        %v1325 = vsub.f32 1.0, %v701
        %v1326 = vsub.f32 1.0, %v702
        %v1327 = vsub.f32 1.0, %v703
        %v1328 = vsub.f32 1.0, %v704
        %v1329 = vsub.f32 1.0, %v705
        %v1330 = vsub.f32 1.0, %v706
        %v1331 = vsub.f32 1.0, %v707
        %v1332 = vsub.f32 1.0, %v708
        %v1333 = vsub.f32 1.0, %v709
        %v1334 = vsub.f32 1.0, %v710
        %v1335 = vsub.f32 1.0, %v711
        %v1336 = vmin.f32 %v696, %v1320
        %v1337 = vmin.f32 %v697, %v1321
        %v1338 = vmin.f32 %v698, %v1322
        %v1339 = vmin.f32 %v699, %v1323
        %v1340 = vmin.f32 %v700, %v1324
        %v1341 = vmin.f32 %v701, %v1325
        %v1342 = vmin.f32 %v702, %v1326
        %v1343 = vmin.f32 %v703, %v1327
        %v1344 = vmin.f32 %v704, %v1328
        %v1345 = vmin.f32 %v705, %v1329
        %v1346 = vmin.f32 %v706, %v1330
        %v1347 = vmin.f32 %v707, %v1331
        %v1348 = vmin.f32 %v708, %v1332
        %v1349 = vmin.f32 %v709, %v1333
        %v1350 = vmin.f32 %v710, %v1334
        %v1351 = vmin.f32 %v711, %v1335
        %v1352 = vmax.f32 %v1336, 1e-30
        %v1353 = vmax.f32 %v1337, 1e-30
        %v1354 = vmax.f32 %v1338, 1e-30
        %v1355 = vmax.f32 %v1339, 1e-30
        %v1356 = vmax.f32 %v1340, 1e-30
        %v1357 = vmax.f32 %v1341, 1e-30
        %v1358 = vmax.f32 %v1342, 1e-30
        %v1359 = vmax.f32 %v1343, 1e-30
        %v1360 = vmax.f32 %v1344, 1e-30
        %v1361 = vmax.f32 %v1345, 1e-30
        %v1362 = vmax.f32 %v1346, 1e-30
        %v1363 = vmax.f32 %v1347, 1e-30
        %v1364 = vmax.f32 %v1348, 1e-30
        %v1365 = vmax.f32 %v1349, 1e-30
        %v1366 = vmax.f32 %v1350, 1e-30
        %v1367 = vmax.f32 %v1351, 1e-30
        %v1368 = vlog2.pop %v1352
        %v1369 = vmul.f32 %v1368, 0.6931472
        %v1370 = vlog2.pop %v1353
        %v1371 = vmul.f32 %v1370, 0.6931472
        %v1372 = vlog2.pop %v1354
        %v1373 = vmul.f32 %v1372, 0.6931472
        %v1374 = vlog2.pop %v1355
        %v1375 = vmul.f32 %v1374, 0.6931472
        %v1376 = vlog2.pop %v1356
        %v1377 = vmul.f32 %v1376, 0.6931472
        %v1378 = vlog2.pop %v1357
        %v1379 = vmul.f32 %v1378, 0.6931472
        %v1380 = vlog2.pop %v1358
        %v1381 = vmul.f32 %v1380, 0.6931472
        %v1382 = vlog2.pop %v1359
        %v1383 = vmul.f32 %v1382, 0.6931472
        %v1384 = vlog2.pop %v1360
        %v1385 = vmul.f32 %v1384, 0.6931472
        %v1386 = vlog2.pop %v1361
        %v1387 = vmul.f32 %v1386, 0.6931472
        %v1388 = vlog2.pop %v1362
        %v1389 = vmul.f32 %v1388, 0.6931472
        %v1390 = vlog2.pop %v1363
        %v1391 = vmul.f32 %v1390, 0.6931472
        %v1392 = vlog2.pop %v1364
        %v1393 = vmul.f32 %v1392, 0.6931472
        %v1394 = vlog2.pop %v1365
        %v1395 = vmul.f32 %v1394, 0.6931472
        %v1396 = vlog2.pop %v1366
        %v1397 = vmul.f32 %v1396, 0.6931472
        %v1398 = vlog2.pop %v1367
        %v1399 = vmul.f32 %v1398, 0.6931472
        %v1400 = vmul.f32 %v1369, -2.0
        %v1401 = vmul.f32 %v1371, -2.0
        %v1402 = vmul.f32 %v1373, -2.0
        %v1403 = vmul.f32 %v1375, -2.0
        %v1404 = vmul.f32 %v1377, -2.0
        %v1405 = vmul.f32 %v1379, -2.0
        %v1406 = vmul.f32 %v1381, -2.0
        %v1407 = vmul.f32 %v1383, -2.0
        %v1408 = vmul.f32 %v1385, -2.0
        %v1409 = vmul.f32 %v1387, -2.0
        %v1410 = vmul.f32 %v1389, -2.0
        %v1411 = vmul.f32 %v1391, -2.0
        %v1412 = vmul.f32 %v1393, -2.0
        %v1413 = vmul.f32 %v1395, -2.0
        %v1414 = vmul.f32 %v1397, -2.0
        %v1415 = vmul.f32 %v1399, -2.0
        %v1416 = vrsqrt.pop %v1400
        %v1417 = vmul.f32 %v1416, %v1400
        %v1418 = vmul.f32 %v1417, %v1416
        %v1419 = vmul.f32 0.5, %v1418
        %v1420 = vsub.f32 1.5, %v1419
        %v1421 = vmul.f32 %v1416, %v1420
        %v1422 = vmul.f32 %v1400, %v1421
        %vm1423 = vcmp.eq.f32.partialorder %v1400, inf
        %v1424 = vsel %vm1423, %v1400, %v1422
        %vm1425 = vcmp.eq.f32.partialorder %v1400, 0.0
        %v1426 = vand.u32 %v1400, 2147483648
        %v1427 = vsel %vm1425, %v1426, %v1424
        %v1428 = vrsqrt.pop %v1401
        %v1429 = vmul.f32 %v1428, %v1401
        %v1430 = vmul.f32 %v1429, %v1428
        %v1431 = vmul.f32 0.5, %v1430
        %v1432 = vsub.f32 1.5, %v1431
        %v1433 = vmul.f32 %v1428, %v1432
        %v1434 = vmul.f32 %v1401, %v1433
        %vm1435 = vcmp.eq.f32.partialorder %v1401, inf
        %v1436 = vsel %vm1435, %v1401, %v1434
        %vm1437 = vcmp.eq.f32.partialorder %v1401, 0.0
        %v1438 = vand.u32 %v1401, 2147483648
        %v1439 = vsel %vm1437, %v1438, %v1436
        %v1440 = vrsqrt.pop %v1402
        %v1441 = vmul.f32 %v1440, %v1402
        %v1442 = vmul.f32 %v1441, %v1440
        %v1443 = vmul.f32 0.5, %v1442
        %v1444 = vsub.f32 1.5, %v1443
        %v1445 = vmul.f32 %v1440, %v1444
        %v1446 = vmul.f32 %v1402, %v1445
        %vm1447 = vcmp.eq.f32.partialorder %v1402, inf
        %v1448 = vsel %vm1447, %v1402, %v1446
        %vm1449 = vcmp.eq.f32.partialorder %v1402, 0.0
        %v1450 = vand.u32 %v1402, 2147483648
        %v1451 = vsel %vm1449, %v1450, %v1448
        %v1452 = vrsqrt.pop %v1403
        %v1453 = vmul.f32 %v1452, %v1403
        %v1454 = vmul.f32 %v1453, %v1452
        %v1455 = vmul.f32 0.5, %v1454
        %v1456 = vsub.f32 1.5, %v1455
        %v1457 = vmul.f32 %v1452, %v1456
        %v1458 = vmul.f32 %v1403, %v1457
        %vm1459 = vcmp.eq.f32.partialorder %v1403, inf
        %v1460 = vsel %vm1459, %v1403, %v1458
        %vm1461 = vcmp.eq.f32.partialorder %v1403, 0.0
        %v1462 = vand.u32 %v1403, 2147483648
        %v1463 = vsel %vm1461, %v1462, %v1460
        %v1464 = vrsqrt.pop %v1404
        %v1465 = vmul.f32 %v1464, %v1404
        %v1466 = vmul.f32 %v1465, %v1464
        %v1467 = vmul.f32 0.5, %v1466
        %v1468 = vsub.f32 1.5, %v1467
        %v1469 = vmul.f32 %v1464, %v1468
        %v1470 = vmul.f32 %v1404, %v1469
        %vm1471 = vcmp.eq.f32.partialorder %v1404, inf
        %v1472 = vsel %vm1471, %v1404, %v1470
        %vm1473 = vcmp.eq.f32.partialorder %v1404, 0.0
        %v1474 = vand.u32 %v1404, 2147483648
        %v1475 = vsel %vm1473, %v1474, %v1472
        %v1476 = vrsqrt.pop %v1405
        %v1477 = vmul.f32 %v1476, %v1405
        %v1478 = vmul.f32 %v1477, %v1476
        %v1479 = vmul.f32 0.5, %v1478
        %v1480 = vsub.f32 1.5, %v1479
        %v1481 = vmul.f32 %v1476, %v1480
        %v1482 = vmul.f32 %v1405, %v1481
        %vm1483 = vcmp.eq.f32.partialorder %v1405, inf
        %v1484 = vsel %vm1483, %v1405, %v1482
        %vm1485 = vcmp.eq.f32.partialorder %v1405, 0.0
        %v1486 = vand.u32 %v1405, 2147483648
        %v1487 = vsel %vm1485, %v1486, %v1484
        %v1488 = vrsqrt.pop %v1406
        %v1489 = vmul.f32 %v1488, %v1406
        %v1490 = vmul.f32 %v1489, %v1488
        %v1491 = vmul.f32 0.5, %v1490
        %v1492 = vsub.f32 1.5, %v1491
        %v1493 = vmul.f32 %v1488, %v1492
        %v1494 = vmul.f32 %v1406, %v1493
        %vm1495 = vcmp.eq.f32.partialorder %v1406, inf
        %v1496 = vsel %vm1495, %v1406, %v1494
        %vm1497 = vcmp.eq.f32.partialorder %v1406, 0.0
        %v1498 = vand.u32 %v1406, 2147483648
        %v1499 = vsel %vm1497, %v1498, %v1496
        %v1500 = vrsqrt.pop %v1407
        %v1501 = vmul.f32 %v1500, %v1407
        %v1502 = vmul.f32 %v1501, %v1500
        %v1503 = vmul.f32 0.5, %v1502
        %v1504 = vsub.f32 1.5, %v1503
        %v1505 = vmul.f32 %v1500, %v1504
        %v1506 = vmul.f32 %v1407, %v1505
        %vm1507 = vcmp.eq.f32.partialorder %v1407, inf
        %v1508 = vsel %vm1507, %v1407, %v1506
        %vm1509 = vcmp.eq.f32.partialorder %v1407, 0.0
        %v1510 = vand.u32 %v1407, 2147483648
        %v1511 = vsel %vm1509, %v1510, %v1508
        %v1512 = vrsqrt.pop %v1408
        %v1513 = vmul.f32 %v1512, %v1408
        %v1514 = vmul.f32 %v1513, %v1512
        %v1515 = vmul.f32 0.5, %v1514
        %v1516 = vsub.f32 1.5, %v1515
        %v1517 = vmul.f32 %v1512, %v1516
        %v1518 = vmul.f32 %v1408, %v1517
        %vm1519 = vcmp.eq.f32.partialorder %v1408, inf
        %v1520 = vsel %vm1519, %v1408, %v1518
        %vm1521 = vcmp.eq.f32.partialorder %v1408, 0.0
        %v1522 = vand.u32 %v1408, 2147483648
        %v1523 = vsel %vm1521, %v1522, %v1520
        %v1524 = vrsqrt.pop %v1409
        %v1525 = vmul.f32 %v1524, %v1409
        %v1526 = vmul.f32 %v1525, %v1524
        %v1527 = vmul.f32 0.5, %v1526
        %v1528 = vsub.f32 1.5, %v1527
        %v1529 = vmul.f32 %v1524, %v1528
        %v1530 = vmul.f32 %v1409, %v1529
        %vm1531 = vcmp.eq.f32.partialorder %v1409, inf
        %v1532 = vsel %vm1531, %v1409, %v1530
        %vm1533 = vcmp.eq.f32.partialorder %v1409, 0.0
        %v1534 = vand.u32 %v1409, 2147483648
        %v1535 = vsel %vm1533, %v1534, %v1532
        %v1536 = vrsqrt.pop %v1410
        %v1537 = vmul.f32 %v1536, %v1410
        %v1538 = vmul.f32 %v1537, %v1536
        %v1539 = vmul.f32 0.5, %v1538
        %v1540 = vsub.f32 1.5, %v1539
        %v1541 = vmul.f32 %v1536, %v1540
        %v1542 = vmul.f32 %v1410, %v1541
        %vm1543 = vcmp.eq.f32.partialorder %v1410, inf
        %v1544 = vsel %vm1543, %v1410, %v1542
        %vm1545 = vcmp.eq.f32.partialorder %v1410, 0.0
        %v1546 = vand.u32 %v1410, 2147483648
        %v1547 = vsel %vm1545, %v1546, %v1544
        %v1548 = vrsqrt.pop %v1411
        %v1549 = vmul.f32 %v1548, %v1411
        %v1550 = vmul.f32 %v1549, %v1548
        %v1551 = vmul.f32 0.5, %v1550
        %v1552 = vsub.f32 1.5, %v1551
        %v1553 = vmul.f32 %v1548, %v1552
        %v1554 = vmul.f32 %v1411, %v1553
        %vm1555 = vcmp.eq.f32.partialorder %v1411, inf
        %v1556 = vsel %vm1555, %v1411, %v1554
        %vm1557 = vcmp.eq.f32.partialorder %v1411, 0.0
        %v1558 = vand.u32 %v1411, 2147483648
        %v1559 = vsel %vm1557, %v1558, %v1556
        %v1560 = vrsqrt.pop %v1412
        %v1561 = vmul.f32 %v1560, %v1412
        %v1562 = vmul.f32 %v1561, %v1560
        %v1563 = vmul.f32 0.5, %v1562
        %v1564 = vsub.f32 1.5, %v1563
        %v1565 = vmul.f32 %v1560, %v1564
        %v1566 = vmul.f32 %v1412, %v1565
        %vm1567 = vcmp.eq.f32.partialorder %v1412, inf
        %v1568 = vsel %vm1567, %v1412, %v1566
        %vm1569 = vcmp.eq.f32.partialorder %v1412, 0.0
        %v1570 = vand.u32 %v1412, 2147483648
        %v1571 = vsel %vm1569, %v1570, %v1568
        %v1572 = vrsqrt.pop %v1413
        %v1573 = vmul.f32 %v1572, %v1413
        %v1574 = vmul.f32 %v1573, %v1572
        %v1575 = vmul.f32 0.5, %v1574
        %v1576 = vsub.f32 1.5, %v1575
        %v1577 = vmul.f32 %v1572, %v1576
        %v1578 = vmul.f32 %v1413, %v1577
        %vm1579 = vcmp.eq.f32.partialorder %v1413, inf
        %v1580 = vsel %vm1579, %v1413, %v1578
        %vm1581 = vcmp.eq.f32.partialorder %v1413, 0.0
        %v1582 = vand.u32 %v1413, 2147483648
        %v1583 = vsel %vm1581, %v1582, %v1580
        %v1584 = vrsqrt.pop %v1414
        %v1585 = vmul.f32 %v1584, %v1414
        %v1586 = vmul.f32 %v1585, %v1584
        %v1587 = vmul.f32 0.5, %v1586
        %v1588 = vsub.f32 1.5, %v1587
        %v1589 = vmul.f32 %v1584, %v1588
        %v1590 = vmul.f32 %v1414, %v1589
        %vm1591 = vcmp.eq.f32.partialorder %v1414, inf
        %v1592 = vsel %vm1591, %v1414, %v1590
        %vm1593 = vcmp.eq.f32.partialorder %v1414, 0.0
        %v1594 = vand.u32 %v1414, 2147483648
        %v1595 = vsel %vm1593, %v1594, %v1592
        %v1596 = vrsqrt.pop %v1415
        %v1597 = vmul.f32 %v1596, %v1415
        %v1598 = vmul.f32 %v1597, %v1596
        %v1599 = vmul.f32 0.5, %v1598
        %v1600 = vsub.f32 1.5, %v1599
        %v1601 = vmul.f32 %v1596, %v1600
        %v1602 = vmul.f32 %v1415, %v1601
        %vm1603 = vcmp.eq.f32.partialorder %v1415, inf
        %v1604 = vsel %vm1603, %v1415, %v1602
        %vm1605 = vcmp.eq.f32.partialorder %v1415, 0.0
        %v1606 = vand.u32 %v1415, 2147483648
        %v1607 = vsel %vm1605, %v1606, %v1604
        %v1608 = vmul.f32 %v1427, -0.007784894
        %v1609 = vmul.f32 %v1439, -0.007784894
        %v1610 = vmul.f32 %v1451, -0.007784894
        %v1611 = vmul.f32 %v1463, -0.007784894
        %v1612 = vmul.f32 %v1475, -0.007784894
        %v1613 = vmul.f32 %v1487, -0.007784894
        %v1614 = vmul.f32 %v1499, -0.007784894
        %v1615 = vmul.f32 %v1511, -0.007784894
        %v1616 = vmul.f32 %v1523, -0.007784894
        %v1617 = vmul.f32 %v1535, -0.007784894
        %v1618 = vmul.f32 %v1547, -0.007784894
        %v1619 = vmul.f32 %v1559, -0.007784894
        %v1620 = vmul.f32 %v1571, -0.007784894
        %v1621 = vmul.f32 %v1583, -0.007784894
        %v1622 = vmul.f32 %v1595, -0.007784894
        %v1623 = vmul.f32 %v1607, -0.007784894
        %v1624 = vadd.f32 %v1608, -0.32239646
        %v1625 = vadd.f32 %v1609, -0.32239646
        %v1626 = vadd.f32 %v1610, -0.32239646
        %v1627 = vadd.f32 %v1611, -0.32239646
        %v1628 = vadd.f32 %v1612, -0.32239646
        %v1629 = vadd.f32 %v1613, -0.32239646
        %v1630 = vadd.f32 %v1614, -0.32239646
        %v1631 = vadd.f32 %v1615, -0.32239646
        %v1632 = vadd.f32 %v1616, -0.32239646
        %v1633 = vadd.f32 %v1617, -0.32239646
        %v1634 = vadd.f32 %v1618, -0.32239646
        %v1635 = vadd.f32 %v1619, -0.32239646
        %v1636 = vadd.f32 %v1620, -0.32239646
        %v1637 = vadd.f32 %v1621, -0.32239646
        %v1638 = vadd.f32 %v1622, -0.32239646
        %v1639 = vadd.f32 %v1623, -0.32239646
        %v1640 = vmul.f32 %v1624, %v1427
        %v1641 = vmul.f32 %v1625, %v1439
        %v1642 = vmul.f32 %v1626, %v1451
        %v1643 = vmul.f32 %v1627, %v1463
        %v1644 = vmul.f32 %v1628, %v1475
        %v1645 = vmul.f32 %v1629, %v1487
        %v1646 = vmul.f32 %v1630, %v1499
        %v1647 = vmul.f32 %v1631, %v1511
        %v1648 = vmul.f32 %v1632, %v1523
        %v1649 = vmul.f32 %v1633, %v1535
        %v1650 = vmul.f32 %v1634, %v1547
        %v1651 = vmul.f32 %v1635, %v1559
        %v1652 = vmul.f32 %v1636, %v1571
        %v1653 = vmul.f32 %v1637, %v1583
        %v1654 = vmul.f32 %v1638, %v1595
        %v1655 = vmul.f32 %v1639, %v1607
        %v1656 = vadd.f32 %v1640, -2.4007583
        %v1657 = vadd.f32 %v1641, -2.4007583
        %v1658 = vadd.f32 %v1642, -2.4007583
        %v1659 = vadd.f32 %v1643, -2.4007583
        %v1660 = vadd.f32 %v1644, -2.4007583
        %v1661 = vadd.f32 %v1645, -2.4007583
        %v1662 = vadd.f32 %v1646, -2.4007583
        %v1663 = vadd.f32 %v1647, -2.4007583
        %v1664 = vadd.f32 %v1648, -2.4007583
        %v1665 = vadd.f32 %v1649, -2.4007583
        %v1666 = vadd.f32 %v1650, -2.4007583
        %v1667 = vadd.f32 %v1651, -2.4007583
        %v1668 = vadd.f32 %v1652, -2.4007583
        %v1669 = vadd.f32 %v1653, -2.4007583
        %v1670 = vadd.f32 %v1654, -2.4007583
        %v1671 = vadd.f32 %v1655, -2.4007583
        %v1672 = vmul.f32 %v1656, %v1427
        %v1673 = vmul.f32 %v1657, %v1439
        %v1674 = vmul.f32 %v1658, %v1451
        %v1675 = vmul.f32 %v1659, %v1463
        %v1676 = vmul.f32 %v1660, %v1475
        %v1677 = vmul.f32 %v1661, %v1487
        %v1678 = vmul.f32 %v1662, %v1499
        %v1679 = vmul.f32 %v1663, %v1511
        %v1680 = vmul.f32 %v1664, %v1523
        %v1681 = vmul.f32 %v1665, %v1535
        %v1682 = vmul.f32 %v1666, %v1547
        %v1683 = vmul.f32 %v1667, %v1559
        %v1684 = vmul.f32 %v1668, %v1571
        %v1685 = vmul.f32 %v1669, %v1583
        %v1686 = vmul.f32 %v1670, %v1595
        %v1687 = vmul.f32 %v1671, %v1607
        %v1688 = vadd.f32 %v1672, -2.5497324
        %v1689 = vadd.f32 %v1673, -2.5497324
        %v1690 = vadd.f32 %v1674, -2.5497324
        %v1691 = vadd.f32 %v1675, -2.5497324
        %v1692 = vadd.f32 %v1676, -2.5497324
        %v1693 = vadd.f32 %v1677, -2.5497324
        %v1694 = vadd.f32 %v1678, -2.5497324
        %v1695 = vadd.f32 %v1679, -2.5497324
        %v1696 = vadd.f32 %v1680, -2.5497324
        %v1697 = vadd.f32 %v1681, -2.5497324
        %v1698 = vadd.f32 %v1682, -2.5497324
        %v1699 = vadd.f32 %v1683, -2.5497324
        %v1700 = vadd.f32 %v1684, -2.5497324
        %v1701 = vadd.f32 %v1685, -2.5497324
        %v1702 = vadd.f32 %v1686, -2.5497324
        %v1703 = vadd.f32 %v1687, -2.5497324
        %v1704 = vmul.f32 %v1688, %v1427
        %v1705 = vmul.f32 %v1689, %v1439
        %v1706 = vmul.f32 %v1690, %v1451
        %v1707 = vmul.f32 %v1691, %v1463
        %v1708 = vmul.f32 %v1692, %v1475
        %v1709 = vmul.f32 %v1693, %v1487
        %v1710 = vmul.f32 %v1694, %v1499
        %v1711 = vmul.f32 %v1695, %v1511
        %v1712 = vmul.f32 %v1696, %v1523
        %v1713 = vmul.f32 %v1697, %v1535
        %v1714 = vmul.f32 %v1698, %v1547
        %v1715 = vmul.f32 %v1699, %v1559
        %v1716 = vmul.f32 %v1700, %v1571
        %v1717 = vmul.f32 %v1701, %v1583
        %v1718 = vmul.f32 %v1702, %v1595
        %v1719 = vmul.f32 %v1703, %v1607
        %v1720 = vadd.f32 %v1704, 4.3746643
        %v1721 = vadd.f32 %v1705, 4.3746643
        %v1722 = vadd.f32 %v1706, 4.3746643
        %v1723 = vadd.f32 %v1707, 4.3746643
        %v1724 = vadd.f32 %v1708, 4.3746643
        %v1725 = vadd.f32 %v1709, 4.3746643
        %v1726 = vadd.f32 %v1710, 4.3746643
        %v1727 = vadd.f32 %v1711, 4.3746643
        %v1728 = vadd.f32 %v1712, 4.3746643
        %v1729 = vadd.f32 %v1713, 4.3746643
        %v1730 = vadd.f32 %v1714, 4.3746643
        %v1731 = vadd.f32 %v1715, 4.3746643
        %v1732 = vadd.f32 %v1716, 4.3746643
        %v1733 = vadd.f32 %v1717, 4.3746643
        %v1734 = vadd.f32 %v1718, 4.3746643
        %v1735 = vadd.f32 %v1719, 4.3746643
        %v1736 = vmul.f32 %v1720, %v1427
        %v1737 = vmul.f32 %v1721, %v1439
        %v1738 = vmul.f32 %v1722, %v1451
        %v1739 = vmul.f32 %v1723, %v1463
        %v1740 = vmul.f32 %v1724, %v1475
        %v1741 = vmul.f32 %v1725, %v1487
        %v1742 = vmul.f32 %v1726, %v1499
        %v1743 = vmul.f32 %v1727, %v1511
        %v1744 = vmul.f32 %v1728, %v1523
        %v1745 = vmul.f32 %v1729, %v1535
        %v1746 = vmul.f32 %v1730, %v1547
        %v1747 = vmul.f32 %v1731, %v1559
        %v1748 = vmul.f32 %v1732, %v1571
        %v1749 = vmul.f32 %v1733, %v1583
        %v1750 = vmul.f32 %v1734, %v1595
        %v1751 = vmul.f32 %v1735, %v1607
        %v1752 = vadd.f32 %v1736, 2.938164
        %v1753 = vadd.f32 %v1737, 2.938164
        %v1754 = vadd.f32 %v1738, 2.938164
        %v1755 = vadd.f32 %v1739, 2.938164
        %v1756 = vadd.f32 %v1740, 2.938164
        %v1757 = vadd.f32 %v1741, 2.938164
        %v1758 = vadd.f32 %v1742, 2.938164
        %v1759 = vadd.f32 %v1743, 2.938164
        %v1760 = vadd.f32 %v1744, 2.938164
        %v1761 = vadd.f32 %v1745, 2.938164
        %v1762 = vadd.f32 %v1746, 2.938164
        %v1763 = vadd.f32 %v1747, 2.938164
        %v1764 = vadd.f32 %v1748, 2.938164
        %v1765 = vadd.f32 %v1749, 2.938164
        %v1766 = vadd.f32 %v1750, 2.938164
        %v1767 = vadd.f32 %v1751, 2.938164
        %v1768 = vmul.f32 %v1427, 0.007784696
        %v1769 = vmul.f32 %v1439, 0.007784696
        %v1770 = vmul.f32 %v1451, 0.007784696
        %v1771 = vmul.f32 %v1463, 0.007784696
        %v1772 = vmul.f32 %v1475, 0.007784696
        %v1773 = vmul.f32 %v1487, 0.007784696
        %v1774 = vmul.f32 %v1499, 0.007784696
        %v1775 = vmul.f32 %v1511, 0.007784696
        %v1776 = vmul.f32 %v1523, 0.007784696
        %v1777 = vmul.f32 %v1535, 0.007784696
        %v1778 = vmul.f32 %v1547, 0.007784696
        %v1779 = vmul.f32 %v1559, 0.007784696
        %v1780 = vmul.f32 %v1571, 0.007784696
        %v1781 = vmul.f32 %v1583, 0.007784696
        %v1782 = vmul.f32 %v1595, 0.007784696
        %v1783 = vmul.f32 %v1607, 0.007784696
        %v1784 = vadd.f32 %v1768, 0.32246712
        %v1785 = vadd.f32 %v1769, 0.32246712
        %v1786 = vadd.f32 %v1770, 0.32246712
        %v1787 = vadd.f32 %v1771, 0.32246712
        %v1788 = vadd.f32 %v1772, 0.32246712
        %v1789 = vadd.f32 %v1773, 0.32246712
        %v1790 = vadd.f32 %v1774, 0.32246712
        %v1791 = vadd.f32 %v1775, 0.32246712
        %v1792 = vadd.f32 %v1776, 0.32246712
        %v1793 = vadd.f32 %v1777, 0.32246712
        %v1794 = vadd.f32 %v1778, 0.32246712
        %v1795 = vadd.f32 %v1779, 0.32246712
        %v1796 = vadd.f32 %v1780, 0.32246712
        %v1797 = vadd.f32 %v1781, 0.32246712
        %v1798 = vadd.f32 %v1782, 0.32246712
        %v1799 = vadd.f32 %v1783, 0.32246712
        %v1800 = vmul.f32 %v1784, %v1427
        %v1801 = vmul.f32 %v1785, %v1439
        %v1802 = vmul.f32 %v1786, %v1451
        %v1803 = vmul.f32 %v1787, %v1463
        %v1804 = vmul.f32 %v1788, %v1475
        %v1805 = vmul.f32 %v1789, %v1487
        %v1806 = vmul.f32 %v1790, %v1499
        %v1807 = vmul.f32 %v1791, %v1511
        %v1808 = vmul.f32 %v1792, %v1523
        %v1809 = vmul.f32 %v1793, %v1535
        %v1810 = vmul.f32 %v1794, %v1547
        %v1811 = vmul.f32 %v1795, %v1559
        %v1812 = vmul.f32 %v1796, %v1571
        %v1813 = vmul.f32 %v1797, %v1583
        %v1814 = vmul.f32 %v1798, %v1595
        %v1815 = vmul.f32 %v1799, %v1607
        %v1816 = vadd.f32 %v1800, 2.4451342
        %v1817 = vadd.f32 %v1801, 2.4451342
        %v1818 = vadd.f32 %v1802, 2.4451342
        %v1819 = vadd.f32 %v1803, 2.4451342
        %v1820 = vadd.f32 %v1804, 2.4451342
        %v1821 = vadd.f32 %v1805, 2.4451342
        %v1822 = vadd.f32 %v1806, 2.4451342
        %v1823 = vadd.f32 %v1807, 2.4451342
        %v1824 = vadd.f32 %v1808, 2.4451342
        %v1825 = vadd.f32 %v1809, 2.4451342
        %v1826 = vadd.f32 %v1810, 2.4451342
        %v1827 = vadd.f32 %v1811, 2.4451342
        %v1828 = vadd.f32 %v1812, 2.4451342
        %v1829 = vadd.f32 %v1813, 2.4451342
        %v1830 = vadd.f32 %v1814, 2.4451342
        %v1831 = vadd.f32 %v1815, 2.4451342
        %v1832 = vmul.f32 %v1816, %v1427
        %v1833 = vmul.f32 %v1817, %v1439
        %v1834 = vmul.f32 %v1818, %v1451
        %v1835 = vmul.f32 %v1819, %v1463
        %v1836 = vmul.f32 %v1820, %v1475
        %v1837 = vmul.f32 %v1821, %v1487
        %v1838 = vmul.f32 %v1822, %v1499
        %v1839 = vmul.f32 %v1823, %v1511
        %v1840 = vmul.f32 %v1824, %v1523
        %v1841 = vmul.f32 %v1825, %v1535
        %v1842 = vmul.f32 %v1826, %v1547
        %v1843 = vmul.f32 %v1827, %v1559
        %v1844 = vmul.f32 %v1828, %v1571
        %v1845 = vmul.f32 %v1829, %v1583
        %v1846 = vmul.f32 %v1830, %v1595
        %v1847 = vmul.f32 %v1831, %v1607
        %v1848 = vadd.f32 %v1832, 3.7544086
        %v1849 = vadd.f32 %v1833, 3.7544086
        %v1850 = vadd.f32 %v1834, 3.7544086
        %v1851 = vadd.f32 %v1835, 3.7544086
        %v1852 = vadd.f32 %v1836, 3.7544086
        %v1853 = vadd.f32 %v1837, 3.7544086
        %v1854 = vadd.f32 %v1838, 3.7544086
        %v1855 = vadd.f32 %v1839, 3.7544086
        %v1856 = vadd.f32 %v1840, 3.7544086
        %v1857 = vadd.f32 %v1841, 3.7544086
        %v1858 = vadd.f32 %v1842, 3.7544086
        %v1859 = vadd.f32 %v1843, 3.7544086
        %v1860 = vadd.f32 %v1844, 3.7544086
        %v1861 = vadd.f32 %v1845, 3.7544086
        %v1862 = vadd.f32 %v1846, 3.7544086
        %v1863 = vadd.f32 %v1847, 3.7544086
        %v1864 = vmul.f32 %v1848, %v1427
        %v1865 = vmul.f32 %v1849, %v1439
        %v1866 = vmul.f32 %v1850, %v1451
        %v1867 = vmul.f32 %v1851, %v1463
        %v1868 = vmul.f32 %v1852, %v1475
        %v1869 = vmul.f32 %v1853, %v1487
        %v1870 = vmul.f32 %v1854, %v1499
        %v1871 = vmul.f32 %v1855, %v1511
        %v1872 = vmul.f32 %v1856, %v1523
        %v1873 = vmul.f32 %v1857, %v1535
        %v1874 = vmul.f32 %v1858, %v1547
        %v1875 = vmul.f32 %v1859, %v1559
        %v1876 = vmul.f32 %v1860, %v1571
        %v1877 = vmul.f32 %v1861, %v1583
        %v1878 = vmul.f32 %v1862, %v1595
        %v1879 = vmul.f32 %v1863, %v1607
        %v1880 = vadd.f32 %v1864, 1.0
        %v1881 = vadd.f32 %v1865, 1.0
        %v1882 = vadd.f32 %v1866, 1.0
        %v1883 = vadd.f32 %v1867, 1.0
        %v1884 = vadd.f32 %v1868, 1.0
        %v1885 = vadd.f32 %v1869, 1.0
        %v1886 = vadd.f32 %v1870, 1.0
        %v1887 = vadd.f32 %v1871, 1.0
        %v1888 = vadd.f32 %v1872, 1.0
        %v1889 = vadd.f32 %v1873, 1.0
        %v1890 = vadd.f32 %v1874, 1.0
        %v1891 = vadd.f32 %v1875, 1.0
        %v1892 = vadd.f32 %v1876, 1.0
        %v1893 = vadd.f32 %v1877, 1.0
        %v1894 = vadd.f32 %v1878, 1.0
        %v1895 = vadd.f32 %v1879, 1.0
        %v1896 = vrcp.pop %v1880
        %v1897 = vmul.f32 %v1880, %v1896
        %v1898 = vsub.f32 1.0, %v1897
        %v1899 = vmul.f32 %v1896, %v1898
        %v1900 = vadd.f32 %v1896, %v1899
        %vm1901 = vweird.f32 %v1880
        %vm1902 = vweird.f32 %v1896
        %vm1903 = vmor %vm1901, %vm1902
        %v1904 = vsel %vm1903, %v1896, %v1900
        %v1905 = vand.u32 2147483647, %v1880
        %vm1906 = vcmp.eq.f32.partialorder %v1905, 8.507059e+37
        %v1907 = vand.u32 %v1880, 2147483648
        %v1908 = vor.u32 1.1754944e-38, %v1907
        %v1909 = vsel %vm1906, %v1908, %v1904
        %v1910 = vmul.f32 %v1752, %v1909
        %v1911 = vrcp.pop %v1881
        %v1912 = vmul.f32 %v1881, %v1911
        %v1913 = vsub.f32 1.0, %v1912
        %v1914 = vmul.f32 %v1911, %v1913
        %v1915 = vadd.f32 %v1911, %v1914
        %vm1916 = vweird.f32 %v1881
        %vm1917 = vweird.f32 %v1911
        %vm1918 = vmor %vm1916, %vm1917
        %v1919 = vsel %vm1918, %v1911, %v1915
        %v1920 = vand.u32 2147483647, %v1881
        %vm1921 = vcmp.eq.f32.partialorder %v1920, 8.507059e+37
        %v1922 = vand.u32 %v1881, 2147483648
        %v1923 = vor.u32 1.1754944e-38, %v1922
        %v1924 = vsel %vm1921, %v1923, %v1919
        %v1925 = vmul.f32 %v1753, %v1924
        %v1926 = vrcp.pop %v1882
        %v1927 = vmul.f32 %v1882, %v1926
        %v1928 = vsub.f32 1.0, %v1927
        %v1929 = vmul.f32 %v1926, %v1928
        %v1930 = vadd.f32 %v1926, %v1929
        %vm1931 = vweird.f32 %v1882
        %vm1932 = vweird.f32 %v1926
        %vm1933 = vmor %vm1931, %vm1932
        %v1934 = vsel %vm1933, %v1926, %v1930
        %v1935 = vand.u32 2147483647, %v1882
        %vm1936 = vcmp.eq.f32.partialorder %v1935, 8.507059e+37
        %v1937 = vand.u32 %v1882, 2147483648
        %v1938 = vor.u32 1.1754944e-38, %v1937
        %v1939 = vsel %vm1936, %v1938, %v1934
        %v1940 = vmul.f32 %v1754, %v1939
        %v1941 = vrcp.pop %v1883
        %v1942 = vmul.f32 %v1883, %v1941
        %v1943 = vsub.f32 1.0, %v1942
        %v1944 = vmul.f32 %v1941, %v1943
        %v1945 = vadd.f32 %v1941, %v1944
        %vm1946 = vweird.f32 %v1883
        %vm1947 = vweird.f32 %v1941
        %vm1948 = vmor %vm1946, %vm1947
        %v1949 = vsel %vm1948, %v1941, %v1945
        %v1950 = vand.u32 2147483647, %v1883
        %vm1951 = vcmp.eq.f32.partialorder %v1950, 8.507059e+37
        %v1952 = vand.u32 %v1883, 2147483648
        %v1953 = vor.u32 1.1754944e-38, %v1952
        %v1954 = vsel %vm1951, %v1953, %v1949
        %v1955 = vmul.f32 %v1755, %v1954
        %v1956 = vrcp.pop %v1884
        %v1957 = vmul.f32 %v1884, %v1956
        %v1958 = vsub.f32 1.0, %v1957
        %v1959 = vmul.f32 %v1956, %v1958
        %v1960 = vadd.f32 %v1956, %v1959
        %vm1961 = vweird.f32 %v1884
        %vm1962 = vweird.f32 %v1956
        %vm1963 = vmor %vm1961, %vm1962
        %v1964 = vsel %vm1963, %v1956, %v1960
        %v1965 = vand.u32 2147483647, %v1884
        %vm1966 = vcmp.eq.f32.partialorder %v1965, 8.507059e+37
        %v1967 = vand.u32 %v1884, 2147483648
        %v1968 = vor.u32 1.1754944e-38, %v1967
        %v1969 = vsel %vm1966, %v1968, %v1964
        %v1970 = vmul.f32 %v1756, %v1969
        %v1971 = vrcp.pop %v1885
        %v1972 = vmul.f32 %v1885, %v1971
        %v1973 = vsub.f32 1.0, %v1972
        %v1974 = vmul.f32 %v1971, %v1973
        %v1975 = vadd.f32 %v1971, %v1974
        %vm1976 = vweird.f32 %v1885
        %vm1977 = vweird.f32 %v1971
        %vm1978 = vmor %vm1976, %vm1977
        %v1979 = vsel %vm1978, %v1971, %v1975
        %v1980 = vand.u32 2147483647, %v1885
        %vm1981 = vcmp.eq.f32.partialorder %v1980, 8.507059e+37
        %v1982 = vand.u32 %v1885, 2147483648
        %v1983 = vor.u32 1.1754944e-38, %v1982
        %v1984 = vsel %vm1981, %v1983, %v1979
        %v1985 = vmul.f32 %v1757, %v1984
        %v1986 = vrcp.pop %v1886
        %v1987 = vmul.f32 %v1886, %v1986
        %v1988 = vsub.f32 1.0, %v1987
        %v1989 = vmul.f32 %v1986, %v1988
        %v1990 = vadd.f32 %v1986, %v1989
        %vm1991 = vweird.f32 %v1886
        %vm1992 = vweird.f32 %v1986
        %vm1993 = vmor %vm1991, %vm1992
        %v1994 = vsel %vm1993, %v1986, %v1990
        %v1995 = vand.u32 2147483647, %v1886
        %vm1996 = vcmp.eq.f32.partialorder %v1995, 8.507059e+37
        %v1997 = vand.u32 %v1886, 2147483648
        %v1998 = vor.u32 1.1754944e-38, %v1997
        %v1999 = vsel %vm1996, %v1998, %v1994
        %v2000 = vmul.f32 %v1758, %v1999
        %v2001 = vrcp.pop %v1887
        %v2002 = vmul.f32 %v1887, %v2001
        %v2003 = vsub.f32 1.0, %v2002
        %v2004 = vmul.f32 %v2001, %v2003
        %v2005 = vadd.f32 %v2001, %v2004
        %vm2006 = vweird.f32 %v1887
        %vm2007 = vweird.f32 %v2001
        %vm2008 = vmor %vm2006, %vm2007
        %v2009 = vsel %vm2008, %v2001, %v2005
        %v2010 = vand.u32 2147483647, %v1887
        %vm2011 = vcmp.eq.f32.partialorder %v2010, 8.507059e+37
        %v2012 = vand.u32 %v1887, 2147483648
        %v2013 = vor.u32 1.1754944e-38, %v2012
        %v2014 = vsel %vm2011, %v2013, %v2009
        %v2015 = vmul.f32 %v1759, %v2014
        %v2016 = vrcp.pop %v1888
        %v2017 = vmul.f32 %v1888, %v2016
        %v2018 = vsub.f32 1.0, %v2017
        %v2019 = vmul.f32 %v2016, %v2018
        %v2020 = vadd.f32 %v2016, %v2019
        %vm2021 = vweird.f32 %v1888
        %vm2022 = vweird.f32 %v2016
        %vm2023 = vmor %vm2021, %vm2022
        %v2024 = vsel %vm2023, %v2016, %v2020
        %v2025 = vand.u32 2147483647, %v1888
        %vm2026 = vcmp.eq.f32.partialorder %v2025, 8.507059e+37
        %v2027 = vand.u32 %v1888, 2147483648
        %v2028 = vor.u32 1.1754944e-38, %v2027
        %v2029 = vsel %vm2026, %v2028, %v2024
        %v2030 = vmul.f32 %v1760, %v2029
        %v2031 = vrcp.pop %v1889
        %v2032 = vmul.f32 %v1889, %v2031
        %v2033 = vsub.f32 1.0, %v2032
        %v2034 = vmul.f32 %v2031, %v2033
        %v2035 = vadd.f32 %v2031, %v2034
        %vm2036 = vweird.f32 %v1889
        %vm2037 = vweird.f32 %v2031
        %vm2038 = vmor %vm2036, %vm2037
        %v2039 = vsel %vm2038, %v2031, %v2035
        %v2040 = vand.u32 2147483647, %v1889
        %vm2041 = vcmp.eq.f32.partialorder %v2040, 8.507059e+37
        %v2042 = vand.u32 %v1889, 2147483648
        %v2043 = vor.u32 1.1754944e-38, %v2042
        %v2044 = vsel %vm2041, %v2043, %v2039
        %v2045 = vmul.f32 %v1761, %v2044
        %v2046 = vrcp.pop %v1890
        %v2047 = vmul.f32 %v1890, %v2046
        %v2048 = vsub.f32 1.0, %v2047
        %v2049 = vmul.f32 %v2046, %v2048
        %v2050 = vadd.f32 %v2046, %v2049
        %vm2051 = vweird.f32 %v1890
        %vm2052 = vweird.f32 %v2046
        %vm2053 = vmor %vm2051, %vm2052
        %v2054 = vsel %vm2053, %v2046, %v2050
        %v2055 = vand.u32 2147483647, %v1890
        %vm2056 = vcmp.eq.f32.partialorder %v2055, 8.507059e+37
        %v2057 = vand.u32 %v1890, 2147483648
        %v2058 = vor.u32 1.1754944e-38, %v2057
        %v2059 = vsel %vm2056, %v2058, %v2054
        %v2060 = vmul.f32 %v1762, %v2059
        %v2061 = vrcp.pop %v1891
        %v2062 = vmul.f32 %v1891, %v2061
        %v2063 = vsub.f32 1.0, %v2062
        %v2064 = vmul.f32 %v2061, %v2063
        %v2065 = vadd.f32 %v2061, %v2064
        %vm2066 = vweird.f32 %v1891
        %vm2067 = vweird.f32 %v2061
        %vm2068 = vmor %vm2066, %vm2067
        %v2069 = vsel %vm2068, %v2061, %v2065
        %v2070 = vand.u32 2147483647, %v1891
        %vm2071 = vcmp.eq.f32.partialorder %v2070, 8.507059e+37
        %v2072 = vand.u32 %v1891, 2147483648
        %v2073 = vor.u32 1.1754944e-38, %v2072
        %v2074 = vsel %vm2071, %v2073, %v2069
        %v2075 = vmul.f32 %v1763, %v2074
        %v2076 = vrcp.pop %v1892
        %v2077 = vmul.f32 %v1892, %v2076
        %v2078 = vsub.f32 1.0, %v2077
        %v2079 = vmul.f32 %v2076, %v2078
        %v2080 = vadd.f32 %v2076, %v2079
        %vm2081 = vweird.f32 %v1892
        %vm2082 = vweird.f32 %v2076
        %vm2083 = vmor %vm2081, %vm2082
        %v2084 = vsel %vm2083, %v2076, %v2080
        %v2085 = vand.u32 2147483647, %v1892
        %vm2086 = vcmp.eq.f32.partialorder %v2085, 8.507059e+37
        %v2087 = vand.u32 %v1892, 2147483648
        %v2088 = vor.u32 1.1754944e-38, %v2087
        %v2089 = vsel %vm2086, %v2088, %v2084
        %v2090 = vmul.f32 %v1764, %v2089
        %v2091 = vrcp.pop %v1893
        %v2092 = vmul.f32 %v1893, %v2091
        %v2093 = vsub.f32 1.0, %v2092
        %v2094 = vmul.f32 %v2091, %v2093
        %v2095 = vadd.f32 %v2091, %v2094
        %vm2096 = vweird.f32 %v1893
        %vm2097 = vweird.f32 %v2091
        %vm2098 = vmor %vm2096, %vm2097
        %v2099 = vsel %vm2098, %v2091, %v2095
        %v2100 = vand.u32 2147483647, %v1893
        %vm2101 = vcmp.eq.f32.partialorder %v2100, 8.507059e+37
        %v2102 = vand.u32 %v1893, 2147483648
        %v2103 = vor.u32 1.1754944e-38, %v2102
        %v2104 = vsel %vm2101, %v2103, %v2099
        %v2105 = vmul.f32 %v1765, %v2104
        %v2106 = vrcp.pop %v1894
        %v2107 = vmul.f32 %v1894, %v2106
        %v2108 = vsub.f32 1.0, %v2107
        %v2109 = vmul.f32 %v2106, %v2108
        %v2110 = vadd.f32 %v2106, %v2109
        %vm2111 = vweird.f32 %v1894
        %vm2112 = vweird.f32 %v2106
        %vm2113 = vmor %vm2111, %vm2112
        %v2114 = vsel %vm2113, %v2106, %v2110
        %v2115 = vand.u32 2147483647, %v1894
        %vm2116 = vcmp.eq.f32.partialorder %v2115, 8.507059e+37
        %v2117 = vand.u32 %v1894, 2147483648
        %v2118 = vor.u32 1.1754944e-38, %v2117
        %v2119 = vsel %vm2116, %v2118, %v2114
        %v2120 = vmul.f32 %v1766, %v2119
        %v2121 = vrcp.pop %v1895
        %v2122 = vmul.f32 %v1895, %v2121
        %v2123 = vsub.f32 1.0, %v2122
        %v2124 = vmul.f32 %v2121, %v2123
        %v2125 = vadd.f32 %v2121, %v2124
        %vm2126 = vweird.f32 %v1895
        %vm2127 = vweird.f32 %v2121
        %vm2128 = vmor %vm2126, %vm2127
        %v2129 = vsel %vm2128, %v2121, %v2125
        %v2130 = vand.u32 2147483647, %v1895
        %vm2131 = vcmp.eq.f32.partialorder %v2130, 8.507059e+37
        %v2132 = vand.u32 %v1895, 2147483648
        %v2133 = vor.u32 1.1754944e-38, %v2132
        %v2134 = vsel %vm2131, %v2133, %v2129
        %v2135 = vmul.f32 %v1767, %v2134
        %vm2136 = vcmp.lt.f32.partialorder %v696, 0.5
        %vm2137 = vcmp.lt.f32.partialorder %v697, 0.5
        %vm2138 = vcmp.lt.f32.partialorder %v698, 0.5
        %vm2139 = vcmp.lt.f32.partialorder %v699, 0.5
        %vm2140 = vcmp.lt.f32.partialorder %v700, 0.5
        %vm2141 = vcmp.lt.f32.partialorder %v701, 0.5
        %vm2142 = vcmp.lt.f32.partialorder %v702, 0.5
        %vm2143 = vcmp.lt.f32.partialorder %v703, 0.5
        %vm2144 = vcmp.lt.f32.partialorder %v704, 0.5
        %vm2145 = vcmp.lt.f32.partialorder %v705, 0.5
        %vm2146 = vcmp.lt.f32.partialorder %v706, 0.5
        %vm2147 = vcmp.lt.f32.partialorder %v707, 0.5
        %vm2148 = vcmp.lt.f32.partialorder %v708, 0.5
        %vm2149 = vcmp.lt.f32.partialorder %v709, 0.5
        %vm2150 = vcmp.lt.f32.partialorder %v710, 0.5
        %vm2151 = vcmp.lt.f32.partialorder %v711, 0.5
        %v2152 = vsub.f32 0.0, %v1910
        %v2153 = vsub.f32 0.0, %v1925
        %v2154 = vsub.f32 0.0, %v1940
        %v2155 = vsub.f32 0.0, %v1955
        %v2156 = vsub.f32 0.0, %v1970
        %v2157 = vsub.f32 0.0, %v1985
        %v2158 = vsub.f32 0.0, %v2000
        %v2159 = vsub.f32 0.0, %v2015
        %v2160 = vsub.f32 0.0, %v2030
        %v2161 = vsub.f32 0.0, %v2045
        %v2162 = vsub.f32 0.0, %v2060
        %v2163 = vsub.f32 0.0, %v2075
        %v2164 = vsub.f32 0.0, %v2090
        %v2165 = vsub.f32 0.0, %v2105
        %v2166 = vsub.f32 0.0, %v2120
        %v2167 = vsub.f32 0.0, %v2135
        %v2168 = vsel %vm2136, %v1910, %v2152
        %v2169 = vsel %vm2137, %v1925, %v2153
        %v2170 = vsel %vm2138, %v1940, %v2154
        %v2171 = vsel %vm2139, %v1955, %v2155
        %v2172 = vsel %vm2140, %v1970, %v2156
        %v2173 = vsel %vm2141, %v1985, %v2157
        %v2174 = vsel %vm2142, %v2000, %v2158
        %v2175 = vsel %vm2143, %v2015, %v2159
        %v2176 = vsel %vm2144, %v2030, %v2160
        %v2177 = vsel %vm2145, %v2045, %v2161
        %v2178 = vsel %vm2146, %v2060, %v2162
        %v2179 = vsel %vm2147, %v2075, %v2163
        %v2180 = vsel %vm2148, %v2090, %v2164
        %v2181 = vsel %vm2149, %v2105, %v2165
        %v2182 = vsel %vm2150, %v2120, %v2166
        %v2183 = vsel %vm2151, %v2135, %v2167
        %vm2184 = vcmp.lt.f32.partialorder %v696, 0.02425
        %vm2185 = vcmp.lt.f32.partialorder %v697, 0.02425
        %vm2186 = vcmp.lt.f32.partialorder %v698, 0.02425
        %vm2187 = vcmp.lt.f32.partialorder %v699, 0.02425
        %vm2188 = vcmp.lt.f32.partialorder %v700, 0.02425
        %vm2189 = vcmp.lt.f32.partialorder %v701, 0.02425
        %vm2190 = vcmp.lt.f32.partialorder %v702, 0.02425
        %vm2191 = vcmp.lt.f32.partialorder %v703, 0.02425
        %vm2192 = vcmp.lt.f32.partialorder %v704, 0.02425
        %vm2193 = vcmp.lt.f32.partialorder %v705, 0.02425
        %vm2194 = vcmp.lt.f32.partialorder %v706, 0.02425
        %vm2195 = vcmp.lt.f32.partialorder %v707, 0.02425
        %vm2196 = vcmp.lt.f32.partialorder %v708, 0.02425
        %vm2197 = vcmp.lt.f32.partialorder %v709, 0.02425
        %vm2198 = vcmp.lt.f32.partialorder %v710, 0.02425
        %vm2199 = vcmp.lt.f32.partialorder %v711, 0.02425
        %vm2200 = vcmp.gt.f32.partialorder %v696, 0.97575
        %vm2201 = vcmp.gt.f32.partialorder %v697, 0.97575
        %vm2202 = vcmp.gt.f32.partialorder %v698, 0.97575
        %vm2203 = vcmp.gt.f32.partialorder %v699, 0.97575
        %vm2204 = vcmp.gt.f32.partialorder %v700, 0.97575
        %vm2205 = vcmp.gt.f32.partialorder %v701, 0.97575
        %vm2206 = vcmp.gt.f32.partialorder %v702, 0.97575
        %vm2207 = vcmp.gt.f32.partialorder %v703, 0.97575
        %vm2208 = vcmp.gt.f32.partialorder %v704, 0.97575
        %vm2209 = vcmp.gt.f32.partialorder %v705, 0.97575
        %vm2210 = vcmp.gt.f32.partialorder %v706, 0.97575
        %vm2211 = vcmp.gt.f32.partialorder %v707, 0.97575
        %vm2212 = vcmp.gt.f32.partialorder %v708, 0.97575
        %vm2213 = vcmp.gt.f32.partialorder %v709, 0.97575
        %vm2214 = vcmp.gt.f32.partialorder %v710, 0.97575
        %vm2215 = vcmp.gt.f32.partialorder %v711, 0.97575
        %vm2216 = vmor %vm2184, %vm2200
        %vm2217 = vmor %vm2185, %vm2201
        %vm2218 = vmor %vm2186, %vm2202
        %vm2219 = vmor %vm2187, %vm2203
        %vm2220 = vmor %vm2188, %vm2204
        %vm2221 = vmor %vm2189, %vm2205
        %vm2222 = vmor %vm2190, %vm2206
        %vm2223 = vmor %vm2191, %vm2207
        %vm2224 = vmor %vm2192, %vm2208
        %vm2225 = vmor %vm2193, %vm2209
        %vm2226 = vmor %vm2194, %vm2210
        %vm2227 = vmor %vm2195, %vm2211
        %vm2228 = vmor %vm2196, %vm2212
        %vm2229 = vmor %vm2197, %vm2213
        %vm2230 = vmor %vm2198, %vm2214
        %vm2231 = vmor %vm2199, %vm2215
        %v2232 = vsel %vm2216, %v2168, %v1094
        %v2233 = vsel %vm2217, %v2169, %v1109
        %v2234 = vsel %vm2218, %v2170, %v1124
        %v2235 = vsel %vm2219, %v2171, %v1139
        %v2236 = vsel %vm2220, %v2172, %v1154
        %v2237 = vsel %vm2221, %v2173, %v1169
        %v2238 = vsel %vm2222, %v2174, %v1184
        %v2239 = vsel %vm2223, %v2175, %v1199
        %v2240 = vsel %vm2224, %v2176, %v1214
        %v2241 = vsel %vm2225, %v2177, %v1229
        %v2242 = vsel %vm2226, %v2178, %v1244
        %v2243 = vsel %vm2227, %v2179, %v1259
        %v2244 = vsel %vm2228, %v2180, %v1274
        %v2245 = vsel %vm2229, %v2181, %v1289
        %v2246 = vsel %vm2230, %v2182, %v1304
        %v2247 = vsel %vm2231, %v2183, %v1319
        %v2248 = vld [vmem:[%s188] sm:$0xff]
        %v2249 = vld [vmem:[%s188 + $0x8] sm:$0xff]
        %v2250 = vld [vmem:[%s188 + $0x10] sm:$0xff]
        %v2251 = vld [vmem:[%s188 + $0x18] sm:$0xff]
        %v2252 = vld [vmem:[%s188 + $0x20] sm:$0xff]
        %v2253 = vld [vmem:[%s188 + $0x28] sm:$0xff]
        %v2254 = vld [vmem:[%s188 + $0x30] sm:$0xff]
        %v2255 = vld [vmem:[%s188 + $0x38] sm:$0xff]
        %v2256 = vld [vmem:[%s188 + $0x40] sm:$0xff]
        %v2257 = vld [vmem:[%s188 + $0x48] sm:$0xff]
        %v2258 = vld [vmem:[%s188 + $0x50] sm:$0xff]
        %v2259 = vld [vmem:[%s188 + $0x58] sm:$0xff]
        %v2260 = vld [vmem:[%s188 + $0x60] sm:$0xff]
        %v2261 = vld [vmem:[%s188 + $0x68] sm:$0xff]
        %v2262 = vld [vmem:[%s188 + $0x70] sm:$0xff]
        %v2263 = vld [vmem:[%s188 + $0x78] sm:$0xff]
        %s2264 = sld [smem:[#allocation3]]
        %v2265 = vstv %s2264
        %v2266 = vmul.f32 %v2265, %v2232
        %v2267 = vmul.f32 %v2265, %v2233
        %v2268 = vmul.f32 %v2265, %v2234
        %v2269 = vmul.f32 %v2265, %v2235
        %v2270 = vmul.f32 %v2265, %v2236
        %v2271 = vmul.f32 %v2265, %v2237
        %v2272 = vmul.f32 %v2265, %v2238
        %v2273 = vmul.f32 %v2265, %v2239
        %v2274 = vmul.f32 %v2265, %v2240
        %v2275 = vmul.f32 %v2265, %v2241
        %v2276 = vmul.f32 %v2265, %v2242
        %v2277 = vmul.f32 %v2265, %v2243
        %v2278 = vmul.f32 %v2265, %v2244
        %v2279 = vmul.f32 %v2265, %v2245
        %v2280 = vmul.f32 %v2265, %v2246
        %v2281 = vmul.f32 %v2265, %v2247
        %v2282 = vadd.f32 %v2248, %v2266
        %v2283 = vadd.f32 %v2249, %v2267
        %v2284 = vadd.f32 %v2250, %v2268
        %v2285 = vadd.f32 %v2251, %v2269
        %v2286 = vadd.f32 %v2252, %v2270
        %v2287 = vadd.f32 %v2253, %v2271
        %v2288 = vadd.f32 %v2254, %v2272
        %v2289 = vadd.f32 %v2255, %v2273
        %v2290 = vadd.f32 %v2256, %v2274
        %v2291 = vadd.f32 %v2257, %v2275
        %v2292 = vadd.f32 %v2258, %v2276
        %v2293 = vadd.f32 %v2259, %v2277
        %v2294 = vadd.f32 %v2260, %v2278
        %v2295 = vadd.f32 %v2261, %v2279
        %v2296 = vadd.f32 %v2262, %v2280
        %v2297 = vadd.f32 %v2263, %v2281
        %2298 = vst [vmem:[%s211] sm:$0xff] %v2282
        %2299 = vst [vmem:[%s211 + $0x8] sm:$0xff] %v2283
        %2300 = vst [vmem:[%s211 + $0x10] sm:$0xff] %v2284
        %2301 = vst [vmem:[%s211 + $0x18] sm:$0xff] %v2285
        %2302 = vst [vmem:[%s211 + $0x20] sm:$0xff] %v2286
        %2303 = vst [vmem:[%s211 + $0x28] sm:$0xff] %v2287
        %2304 = vst [vmem:[%s211 + $0x30] sm:$0xff] %v2288
        %2305 = vst [vmem:[%s211 + $0x38] sm:$0xff] %v2289
        %2306 = vst [vmem:[%s211 + $0x40] sm:$0xff] %v2290
        %2307 = vst [vmem:[%s211 + $0x48] sm:$0xff] %v2291
        %2308 = vst [vmem:[%s211 + $0x50] sm:$0xff] %v2292
        %2309 = vst [vmem:[%s211 + $0x58] sm:$0xff] %v2293
        %2310 = vst [vmem:[%s211 + $0x60] sm:$0xff] %v2294
        %2311 = vst [vmem:[%s211 + $0x68] sm:$0xff] %v2295
        %2312 = vst [vmem:[%s211 + $0x70] sm:$0xff] %v2296
        %2313 = vst [vmem:[%s211 + $0x78] sm:$0xff] %v2297
        %s2314 = sand.u32 %s114, 1
        %s2315 = scalar_lea.sflag [#allocation6], %s2314
        %s2316 = sand.u32 %s114, 1
        %s2317 = smul.addr %s2316, 128
        %s2318 = scalar_lea.vmem [#allocation7], %s2317
        // Predicated region
        $region37: #{_lambda_.1} parent=31 // pred_check
          %p2319 = pneg %p124
        $region38: #{_lambda_.1} parent=31 // pred_check_branch
          %2321 = sbr.rel (%p2319) target = $region40
        $region39: #{_lambda_.1} parent=31 // pred_region
          %s2322 = smul.u32 8, %s26
          %s2323 = smul.u32 2, %s27
          %2325 = vsyncadd %s2315, 0
          %s2326 = smul.addr %s2322, 2
          %s2327 = sadd.s32 %s2323, %s2326
          %s2328 = smul.addr %s2327, 8
          %s2329 = scalar_lea.hbm %s3, %s2328
          %s2330 = sshll.u32 %s2318, 4
          %s2331 = int_to_ptr.vmem [resolvable:$true] %s2330
          %s2332 = sshll.u32 %s2329, 4
          %s2333 = int_to_ptr.hbm [resolvable:$true] %s2332
          %2338 = dma.vmem_to_hbm [thread:$0]  %s2331, 2048, %s2333, %s2315, 256, 256, 16
        $region40: #{_lambda_.1} parent=31 // pred_fallthru
          _
      $region32: #{_lambda_.1} parent=5 // pred_fallthru
        _
      %p2339 = scmp.le.s32.totalorder 2, %s17
      // Predicated region
      $region41: #{_lambda_.1} parent=5 // pred_check
        %p2340 = pneg %p2339
      $region42: #{_lambda_.1} parent=5 // pred_check_branch
        %2342 = sbr.rel (%p2340) target = $region44
      $region43: #{_lambda_.1} parent=5 // pred_region
        %s2343 = ssub.s32 %s17, 2
        // Predicated region
        $region45: #{_lambda_.1} parent=43 // pred_check
          %p2344 = pneg %p130
        $region46: #{_lambda_.1} parent=43 // pred_check_branch
          %2346 = sbr.rel (%p2344) target = $region48
        $region47: #{_lambda_.1} parent=43 // pred_region
          %s2347 = sand.u32 %s115, 1
          %s2348 = scalar_lea.sflag [#allocation6], %s2347
          %s2349 = sand.u32 %s115, 1
          %s2350 = smul.addr %s2349, 128
          %s2351 = scalar_lea.vmem [#allocation7], %s2350
          %2353 = dma.done %s2348, 2048
        $region48: #{_lambda_.1} parent=43 // pred_fallthru
          _
      $region44: #{_lambda_.1} parent=5 // pred_fallthru
        _
    $region6: #{_lambda_.1} parent=1 // loop_footer
      %s21 = sadd.s32 1, %s17
    $region7: #{_lambda_.1} parent=1 // loop_footer_branch
      %16 = sbr.rel target = $region3
    $region8: #{_lambda_.1} parent=1 // loop_exit
      _
    %2354 = vsyncpa [#allocation5], 1
    %s2355 = scalar_lea.sflag [#allocation5], 1
    %2356 = vsyncpa %s2355, 1
    %2357 = vsyncpa [#allocation6], 1
    %s2358 = scalar_lea.sflag [#allocation6], 1
    %2359 = vsyncpa %s2358, 1

</llo_original>
